<compile_context>
chip_gen: v5e
topology: v5e:2x2
jax: 0.10.0
libtpu: 0.0.40
codegen_flags: <defaults>
</compile_context>

<pallas_src>
import functools
import math

import jax
import jax.numpy as jnp
from jax.experimental import pallas as pl
from jax.experimental.pallas import tpu as pltpu


# ------------------------------ in-kernel helpers ----------------------------

def _gelu(x):
    # tanh-approximate GELU
    # TODO(synk): torch.nn.GELU default is exact erf; tanh approx (tiny drift).
    c = 0.7978845608028654
    return 0.5 * x * (1.0 + jnp.tanh(c * (x + 0.044715 * x * x * x)))


def _layernorm(x, g, b, eps):
    mean = jnp.mean(x, axis=-1, keepdims=True)
    var = jnp.mean(jnp.square(x - mean), axis=-1, keepdims=True)
    return (x - mean) * jax.lax.rsqrt(var + eps) * g + b


def _bf16_dot(x, w_ref, b_ref=None):
    """Matmul with bf16 operands, f32 accumulation, optional f32 bias."""
    y = jnp.dot(x.astype(jnp.bfloat16), w_ref[...],
                preferred_element_type=jnp.float32)
    if b_ref is not None:
        y = y + b_ref[...]
    return y


def _vmem_limit(*arrays):
    """Scoped-VMEM budget: double-buffered operand bytes + headroom, clamped."""
    total = sum(int(a.size) * a.dtype.itemsize for a in arrays)
    return int(min(128 * 1024 * 1024,
                   max(8 * 1024 * 1024, 2 * total + 4 * 1024 * 1024)))


# ------------------------------ Pallas kernels -------------------------------

def embed_kernel(p_ref, w_ref, b_ref, pe_ref, o_ref):
    # p: (1, Sp, patch_dim) f32   w: (patch_dim, D) bf16   b: (1, D)  pe: (Sp, D)
    y = _bf16_dot(p_ref[0], w_ref, b_ref)
    o_ref[0] = (y + pe_ref[...]).astype(o_ref.dtype)


def encoder_block_kernel(h_ref, ln1_g, ln1_b, wqkv_ref, bqkv_ref, wo_ref, bo_ref,
                         ln2_g, ln2_b, w1_ref, b1_ref, w2_ref, b2_ref, o_ref,
                         *, eps, num_heads, seq_real, scale):
    """Whole pre-LN encoder block for one batch element, entirely in VMEM."""
    h = h_ref[0].astype(jnp.float32)                    # (Sp, D) residual stream
    sp, d = h.shape
    dh = d // num_heads

    # ---- LN1 + fused QKV projection (W_qkv = [wq | wk | wv]) ----
    x = _layernorm(h, ln1_g[...], ln1_b[...], eps)
    qkv = _bf16_dot(x, wqkv_ref, bqkv_ref)              # (Sp, 3D) f32

    # ---- all-heads attention (in-kernel head split; transposes ride the XLU) ----
    def heads(z):                                        # (Sp, D) -> (H, Sp, dh)
        return z.reshape(sp, num_heads, dh).transpose(1, 0, 2)

    q = heads(qkv[:, 0 * d:1 * d]).astype(jnp.bfloat16)
    k = heads(qkv[:, 1 * d:2 * d]).astype(jnp.bfloat16)
    v = heads(qkv[:, 2 * d:3 * d]).astype(jnp.bfloat16)

    s = jnp.einsum("hqd,hkd->hqk", q, k,
                   preferred_element_type=jnp.float32) * scale
    key_idx = jax.lax.broadcasted_iota(jnp.int32, (1, 1, sp), 2)
    s = jnp.where(key_idx < seq_real, s, -1e30)          # mask padded key positions
    m = jnp.max(s, axis=-1, keepdims=True)
    p = jnp.exp(s - m)
    denom = jnp.sum(p, axis=-1, keepdims=True)
    p = p * pl.reciprocal(denom, approx=True)            # EUP, off the VPU path
    o = jnp.einsum("hqk,hkd->hqd", p.astype(jnp.bfloat16), v,
                   preferred_element_type=jnp.float32)
    attn = o.transpose(1, 0, 2).reshape(sp, d)           # lane-dense (Sp, D)

    # ---- output projection + residual ----
    h1 = h + _bf16_dot(attn, wo_ref, bo_ref)

    # ---- LN2 + MLP(GELU) + residual ----
    x2 = _layernorm(h1, ln2_g[...], ln2_b[...], eps)
    mid = _gelu(_bf16_dot(x2, w1_ref, b1_ref))
    h2 = h1 + _bf16_dot(mid, w2_ref, b2_ref)

    o_ref[0] = h2.astype(o_ref.dtype)


def head_kernel(x_ref, w1_ref, b1_ref, w2_ref, b2_ref, o_ref):
    z = _gelu(_bf16_dot(x_ref[...], w1_ref, b1_ref))
    o_ref[...] = _bf16_dot(z, w2_ref, b2_ref).astype(o_ref.dtype)


# ------------------------------ Pallas wrappers ------------------------------

def pallas_embed(patches, w, b, pos_emb):
    """(B, Sp, pd) @ (pd, D) + b + pos_emb -> (B, Sp, D). One grid step / batch."""
    B, Sp, pd = patches.shape
    D = w.shape[1]
    return pl.pallas_call(
        embed_kernel,
        out_shape=jax.ShapeDtypeStruct((B, Sp, D), jnp.float32),
        grid=(B,),
        in_specs=[
            pl.BlockSpec((1, Sp, pd), lambda i: (i, 0, 0)),
            pl.BlockSpec((pd, D), lambda i: (0, 0)),
            pl.BlockSpec((1, D), lambda i: (0, 0)),
            pl.BlockSpec((Sp, D), lambda i: (0, 0)),
        ],
        out_specs=pl.BlockSpec((1, Sp, D), lambda i: (i, 0, 0)),
        compiler_params=pltpu.CompilerParams(
            dimension_semantics=("parallel",),
            vmem_limit_bytes=_vmem_limit(patches, w, pos_emb)),
    )(patches, w, b.reshape(1, D), pos_emb)


def pallas_encoder_block(h, blk, *, num_heads, seq_real, eps):
    """One fused pallas_call per encoder layer; grid over the batch axis.

    For real ViT sizes (large Sp / D) add a query-tile grid axis and mark the
    constant-index weight specs with pipeline_mode=pl.Buffered(1) to avoid
    double-buffering ~20 MB of weights (critical on v7x's 64 MiB VMEM).
    """
    B, Sp, D = h.shape
    Dm = blk["w1"].shape[1]
    scale = 1.0 / math.sqrt(D // num_heads)
    kernel = functools.partial(encoder_block_kernel, eps=eps,
                               num_heads=num_heads, seq_real=seq_real, scale=scale)
    row = lambda b: (b, 0, 0)
    rep = lambda b: (0, 0)
    return pl.pallas_call(
        kernel,
        out_shape=jax.ShapeDtypeStruct((B, Sp, D), h.dtype),
        grid=(B,),
        in_specs=[
            pl.BlockSpec((1, Sp, D), row),     # residual stream h
            pl.BlockSpec((1, D), rep),         # ln1_g
            pl.BlockSpec((1, D), rep),         # ln1_b
            pl.BlockSpec((D, 3 * D), rep),     # w_qkv (bf16)
            pl.BlockSpec((1, 3 * D), rep),     # b_qkv
            pl.BlockSpec((D, D), rep),         # wo (bf16)
            pl.BlockSpec((1, D), rep),         # bo
            pl.BlockSpec((1, D), rep),         # ln2_g
            pl.BlockSpec((1, D), rep),         # ln2_b
            pl.BlockSpec((D, Dm), rep),        # w1 (bf16)
            pl.BlockSpec((1, Dm), rep),        # b1
            pl.BlockSpec((Dm, D), rep),        # w2 (bf16)
            pl.BlockSpec((1, D), rep),         # b2
        ],
        out_specs=pl.BlockSpec((1, Sp, D), row),
        compiler_params=pltpu.CompilerParams(
            dimension_semantics=("parallel",),
            vmem_limit_bytes=_vmem_limit(
                h, blk["w_qkv"], blk["wo"], blk["w1"], blk["w2"])),
    )(h,
      blk["ln1_g"].reshape(1, D), blk["ln1_b"].reshape(1, D),
      blk["w_qkv"], blk["b_qkv"].reshape(1, 3 * D),
      blk["wo"], blk["bo"].reshape(1, D),
      blk["ln2_g"].reshape(1, D), blk["ln2_b"].reshape(1, D),
      blk["w1"], blk["b1"].reshape(1, Dm),
      blk["w2"], blk["b2"].reshape(1, D))


def pallas_head(x, w1, b1, w2, b2):
    B, D = x.shape
    Dm = w1.shape[1]
    L = w2.shape[1]
    full = lambda i: (0, 0)
    return pl.pallas_call(
        head_kernel,
        out_shape=jax.ShapeDtypeStruct((B, L), x.dtype),
        grid=(1,),
        in_specs=[
            pl.BlockSpec((B, D), full),
            pl.BlockSpec((D, Dm), full),
            pl.BlockSpec((1, Dm), full),
            pl.BlockSpec((Dm, L), full),
            pl.BlockSpec((1, L), full),
        ],
        out_specs=pl.BlockSpec((B, L), full),
        compiler_params=pltpu.CompilerParams(
            vmem_limit_bytes=_vmem_limit(x, w1, w2)),
    )(x, w1, b1.reshape(1, Dm), w2, b2.reshape(1, L))


# ------------------------------ model (glue) ---------------------------------

def to_patches(x, patch_size, num_patches_plus_cls):
    """F.unfold(kernel=P, stride=P) + zero [CLS] column. (B,C,H,W)->(B,C*P*P,N+1)."""
    B, C, H, W = x.shape
    P = patch_size
    xp = x.reshape(B, C, H // P, P, W // P, P)
    xp = xp.transpose(0, 1, 3, 5, 2, 4).reshape(B, C * P * P, (H // P) * (W // P))
    assert xp.shape[-1] == num_patches_plus_cls - 1, "Problems with num_patches in ViT"
    cls = jnp.zeros((B, C * P * P, 1), xp.dtype)
    return jnp.concatenate([cls, xp], axis=-1)


def vit_forward(params, x, cfg):
    P = cfg["patch_size"]
    D = cfg["hidden_size"]
    S = cfg["num_patches"] + 1
    Sp = cfg["seq_pad"]
    H = cfg["num_heads"]
    eps = cfg["ln_eps"]

    patches = to_patches(x, P, S).transpose(0, 2, 1)             # (B, S, C*P*P)
    # Pad sequence to a multiple of 8 sublanes; padded rows stay inert
    # (masked out of attention, never read back).
    patches = jnp.pad(patches, ((0, 0), (0, Sp - S), (0, 0)))
    pos_emb = jnp.pad(params["pos_emb"], ((0, Sp - S), (0, 0)))

    h = pallas_embed(patches, params["emb_w"], params["emb_b"], pos_emb)  # (B,Sp,D)

    for blk in params["blocks"]:
        h = pallas_encoder_block(h, blk, num_heads=H, seq_real=S, eps=eps)

    cls = h[:, 0, :]                                             # (B, D)
    return pallas_head(cls, params["head_w1"], params["head_b1"],
                       params["head_w2"], params["head_b2"])     # (B, labels)


# ------------------------------ parameter init -------------------------------

def init_params(key, cfg):
    D = cfg["hidden_size"]
    P = cfg["patch_size"]
    C = cfg["channels"]
    S = cfg["num_patches"] + 1
    patch_dim = C * P * P
    mlp_enc = 4 * D  # TODO(synk): encoder MLP hidden size not specified; use 4*D

    keys = jax.random.split(key, 4 + 4 * cfg["num_layers"])

    def dense(k, fi, fo):
        # weights stored bf16 (MXU-native, halves weight DMA/VMEM); f32 accum in-kernel
        return (0.02 * jax.random.normal(k, (fi, fo), jnp.float32)).astype(jnp.bfloat16)

    params = {
        "emb_w": dense(keys[0], patch_dim, D),
        "emb_b": jnp.zeros((D,), jnp.float32),
        "pos_emb": 0.02 * jax.random.normal(keys[1], (S, D), jnp.float32),
        "head_w1": dense(keys[2], D, cfg["mlp_head_size"]),
        "head_b1": jnp.zeros((cfg["mlp_head_size"],), jnp.float32),
        "head_w2": dense(keys[3], cfg["mlp_head_size"], cfg["num_labels"]),
        "head_b2": jnp.zeros((cfg["num_labels"],), jnp.float32),
    }

    blocks = []
    ki = 4
    for _ in range(cfg["num_layers"]):
        blk = {
            "ln1_g": jnp.ones((D,), jnp.float32), "ln1_b": jnp.zeros((D,), jnp.float32),
            "w_qkv": dense(keys[ki + 0], D, 3 * D),          # [wq | wk | wv] fused
            "b_qkv": jnp.zeros((3 * D,), jnp.float32),
            "wo": dense(keys[ki + 1], D, D), "bo": jnp.zeros((D,), jnp.float32),
            "ln2_g": jnp.ones((D,), jnp.float32), "ln2_b": jnp.zeros((D,), jnp.float32),
            "w1": dense(keys[ki + 2], D, mlp_enc), "b1": jnp.zeros((mlp_enc,), jnp.float32),
            "w2": dense(keys[ki + 3], mlp_enc, D), "b2": jnp.zeros((D,), jnp.float32),
        }
        blocks.append(blk)
        ki += 4
    params["blocks"] = blocks
    return params


# ----------------------------------- main ------------------------------------

if __name__ == "__main__":
    cfg = dict(
        num_labels=10,
        patch_size=8,
        num_patches=4,      # (16/8)*(16/8) spatial patches
        num_layers=2,
        num_heads=4,
        hidden_size=32,
        mlp_head_size=64,
        channels=4,
        image_size=16,
        ln_eps=1e-5,
    )
    cfg["seq_pad"] = ((cfg["num_patches"] + 1 + 7) // 8) * 8   # pad seq to 8 sublanes

    key = jax.random.PRNGKey(0)
    pkey, xkey = jax.random.split(key)
    params = init_params(pkey, cfg)
    x = jax.random.normal(
        xkey, (2, cfg["channels"], cfg["image_size"], cfg["image_size"]), jnp.float32
    )

    fwd = jax.jit(lambda p, xx: vit_forward(p, xx, cfg))
    logits = fwd(params, x)
    jax.block_until_ready(logits)

    assert logits.shape == (2, cfg["num_labels"]), logits.shape
    assert bool(jnp.all(jnp.isfinite(logits)))
    print("KERNEL_OK")
</pallas_src>

<mosaic_0001>
module attributes {stable_mosaic.version = 11 : i64} {
  func.func @embed_kernel(%arg0: i32, %arg1: memref<1x8x256xf32, #tpu.memory_space<vmem>>, %arg2: memref<256x32xbf16, #tpu.memory_space<vmem>>, %arg3: memref<1x32xf32, #tpu.memory_space<vmem>>, %arg4: memref<8x32xf32, #tpu.memory_space<vmem>>, %arg5: memref<1x8x32xf32, #tpu.memory_space<vmem>>) attributes {dimension_semantics = [#tpu.dimension_semantics<parallel>], iteration_bounds = array<i64: 2>, scalar_prefetch = 0 : i64, scratch_operands = 0 : i64, tpu.core_type = #tpu.core_type<tc>, window_params = [{transform_indices = @transform_0, window_bounds = array<i64: 1, 8, 256>}, {pipeline_mode = #tpu.pipeline_mode<synchronous>, transform_indices = @transform_1, window_bounds = array<i64: 256, 32>}, {pipeline_mode = #tpu.pipeline_mode<synchronous>, transform_indices = @transform_2, window_bounds = array<i64: 1, 32>}, {pipeline_mode = #tpu.pipeline_mode<synchronous>, transform_indices = @transform_3, window_bounds = array<i64: 8, 32>}, {transform_indices = @transform_4, window_bounds = array<i64: 1, 8, 32>}]} {
    %c0 = arith.constant 0 : index
    %c0_0 = arith.constant 0 : index
    %c0_1 = arith.constant 0 : index
    %0 = vector.load %arg1[%c0, %c0_0, %c0_1] : memref<1x8x256xf32, #tpu.memory_space<vmem>>, vector<1x8x256xf32>
    %1 = vector.shape_cast %0 : vector<1x8x256xf32> to vector<8x256xf32>
    %2 = arith.truncf %1 : vector<8x256xf32> to vector<8x256xbf16>
    %c0_2 = arith.constant 0 : index
    %c0_3 = arith.constant 0 : index
    %3 = vector.load %arg2[%c0_2, %c0_3] : memref<256x32xbf16, #tpu.memory_space<vmem>>, vector<256x32xbf16>
    %cst = arith.constant dense<0.000000e+00> : vector<8x32xf32>
    %4 = tpu.matmul %2, %3, %cst {dimension_numbers = #tpu.dot_dimension_numbers<[1], [0], [0], [1], [0, 0, 1, 1], [], []>} : vector<8x256xbf16>, vector<256x32xbf16>, vector<8x32xf32> -> vector<8x32xf32>
    %c0_4 = arith.constant 0 : index
    %c0_5 = arith.constant 0 : index
    %5 = vector.load %arg3[%c0_4, %c0_5] : memref<1x32xf32, #tpu.memory_space<vmem>>, vector<1x32xf32>
    %6 = vector.broadcast %5 : vector<1x32xf32> to vector<8x32xf32>
    %7 = arith.addf %4, %6 : vector<8x32xf32>
    %c0_6 = arith.constant 0 : index
    %c0_7 = arith.constant 0 : index
    %8 = vector.load %arg4[%c0_6, %c0_7] : memref<8x32xf32, #tpu.memory_space<vmem>>, vector<8x32xf32>
    %9 = arith.addf %7, %8 : vector<8x32xf32>
    %c0_8 = arith.constant 0 : index
    %c0_9 = arith.constant 0 : index
    %c0_10 = arith.constant 0 : index
    %10 = vector.load %arg5[%c0_8, %c0_9, %c0_10] : memref<1x8x32xf32, #tpu.memory_space<vmem>>, vector<1x8x32xf32>
    %11 = vector.shape_cast %10 : vector<1x8x32xf32> to vector<8x32xf32>
    %12 = vector.shape_cast %9 : vector<8x32xf32> to vector<1x8x32xf32>
    tpu.vector_store %arg5[%c0_8, %c0_9, %c0_10], %12 {strides = array<i32>} : memref<1x8x32xf32, #tpu.memory_space<vmem>>, vector<1x8x32xf32>,
    return
  }
  func.func @transform_0(%arg0: i32) -> (i32, i32, i32) {
    %c0_i32 = arith.constant 0 : i32
    %c0_i32_0 = arith.constant 0 : i32
    %c0_i32_1 = arith.constant 0 : i32
    return %arg0, %c0_i32, %c0_i32_0 : i32, i32, i32
  }
  func.func @transform_1(%arg0: i32) -> (i32, i32) {
    %c0_i32 = arith.constant 0 : i32
    %c0_i32_0 = arith.constant 0 : i32
    %c0_i32_1 = arith.constant 0 : i32
    return %c0_i32, %c0_i32_0 : i32, i32
  }
  func.func @transform_2(%arg0: i32) -> (i32, i32) {
    %c0_i32 = arith.constant 0 : i32
    %c0_i32_0 = arith.constant 0 : i32
    %c0_i32_1 = arith.constant 0 : i32
    return %c0_i32, %c0_i32_0 : i32, i32
  }
  func.func @transform_3(%arg0: i32) -> (i32, i32) {
    %c0_i32 = arith.constant 0 : i32
    %c0_i32_0 = arith.constant 0 : i32
    %c0_i32_1 = arith.constant 0 : i32
    return %c0_i32, %c0_i32_0 : i32, i32
  }
  func.func @transform_4(%arg0: i32) -> (i32, i32, i32) {
    %c0_i32 = arith.constant 0 : i32
    %c0_i32_0 = arith.constant 0 : i32
    %c0_i32_1 = arith.constant 0 : i32
    return %arg0, %c0_i32, %c0_i32_0 : i32, i32, i32
  }
}

module attributes {stable_mosaic.version = 11 : i64} {
  func.func @encoder_block_kernel(%arg0: i32, %arg1: memref<1x8x32xf32, #tpu.memory_space<vmem>>, %arg2: memref<1x32xf32, #tpu.memory_space<vmem>>, %arg3: memref<1x32xf32, #tpu.memory_space<vmem>>, %arg4: memref<32x96xbf16, #tpu.memory_space<vmem>>, %arg5: memref<1x96xf32, #tpu.memory_space<vmem>>, %arg6: memref<32x32xbf16, #tpu.memory_space<vmem>>, %arg7: memref<1x32xf32, #tpu.memory_space<vmem>>, %arg8: memref<1x32xf32, #tpu.memory_space<vmem>>, %arg9: memref<1x32xf32, #tpu.memory_space<vmem>>, %arg10: memref<32x128xbf16, #tpu.memory_space<vmem>>, %arg11: memref<1x128xf32, #tpu.memory_space<vmem>>, %arg12: memref<128x32xbf16, #tpu.memory_space<vmem>>, %arg13: memref<1x32xf32, #tpu.memory_space<vmem>>, %arg14: memref<1x8x32xf32, #tpu.memory_space<vmem>>) attributes {dimension_semantics = [#tpu.dimension_semantics<parallel>], iteration_bounds = array<i64: 2>, scalar_prefetch = 0 : i64, scratch_operands = 0 : i64, tpu.core_type = #tpu.core_type<tc>, window_params = [{transform_indices = @transform_0, window_bounds = array<i64: 1, 8, 32>}, {pipeline_mode = #tpu.pipeline_mode<synchronous>, transform_indices = @transform_1, window_bounds = array<i64: 1, 32>}, {pipeline_mode = #tpu.pipeline_mode<synchronous>, transform_indices = @transform_2, window_bounds = array<i64: 1, 32>}, {pipeline_mode = #tpu.pipeline_mode<synchronous>, transform_indices = @transform_3, window_bounds = array<i64: 32, 96>}, {pipeline_mode = #tpu.pipeline_mode<synchronous>, transform_indices = @transform_4, window_bounds = array<i64: 1, 96>}, {pipeline_mode = #tpu.pipeline_mode<synchronous>, transform_indices = @transform_5, window_bounds = array<i64: 32, 32>}, {pipeline_mode = #tpu.pipeline_mode<synchronous>, transform_indices = @transform_6, window_bounds = array<i64: 1, 32>}, {pipeline_mode = #tpu.pipeline_mode<synchronous>, transform_indices = @transform_7, window_bounds = array<i64: 1, 32>}, {pipeline_mode = #tpu.pipeline_mode<synchronous>, transform_indices = @transform_8, window_bounds = array<i64: 1, 32>}, {pipeline_mode = #tpu.pipeline_mode<synchronous>, transform_indices = @transform_9, window_bounds = array<i64: 32, 128>}, {pipeline_mode = #tpu.pipeline_mode<synchronous>, transform_indices = @transform_10, window_bounds = array<i64: 1, 128>}, {pipeline_mode = #tpu.pipeline_mode<synchronous>, transform_indices = @transform_11, window_bounds = array<i64: 128, 32>}, {pipeline_mode = #tpu.pipeline_mode<synchronous>, transform_indices = @transform_12, window_bounds = array<i64: 1, 32>}, {transform_indices = @transform_13, window_bounds = array<i64: 1, 8, 32>}]} {
    %c0 = arith.constant 0 : index
    %c0_0 = arith.constant 0 : index
    %c0_1 = arith.constant 0 : index
    %0 = vector.load %arg1[%c0, %c0_0, %c0_1] : memref<1x8x32xf32, #tpu.memory_space<vmem>>, vector<1x8x32xf32>
    %1 = vector.shape_cast %0 : vector<1x8x32xf32> to vector<8x32xf32>
    %c0_2 = arith.constant 0 : index
    %c0_3 = arith.constant 0 : index
    %2 = vector.load %arg2[%c0_2, %c0_3] : memref<1x32xf32, #tpu.memory_space<vmem>>, vector<1x32xf32>
    %c0_4 = arith.constant 0 : index
    %c0_5 = arith.constant 0 : index
    %3 = vector.load %arg3[%c0_4, %c0_5] : memref<1x32xf32, #tpu.memory_space<vmem>>, vector<1x32xf32>
    %cst = arith.constant dense<0.000000e+00> : vector<8xf32>
    %4 = vector.multi_reduction <add>, %1, %cst [1] : vector<8x32xf32> to vector<8xf32>
    %5 = vector.shape_cast %4 : vector<8xf32> to vector<8x1xf32>
    %cst_6 = arith.constant 3.200000e+01 : f32
    %6 = vector.broadcast %cst_6 : f32 to vector<8x1xf32>
    %7 = arith.divf %5, %6 : vector<8x1xf32>
    %8 = vector.broadcast %7 : vector<8x1xf32> to vector<8x32xf32>
    %9 = arith.subf %1, %8 : vector<8x32xf32>
    %10 = arith.mulf %9, %9 : vector<8x32xf32>
    %cst_7 = arith.constant dense<0.000000e+00> : vector<8xf32>
    %11 = vector.multi_reduction <add>, %10, %cst_7 [1] : vector<8x32xf32> to vector<8xf32>
    %12 = vector.shape_cast %11 : vector<8xf32> to vector<8x1xf32>
    %cst_8 = arith.constant 3.200000e+01 : f32
    %13 = vector.broadcast %cst_8 : f32 to vector<8x1xf32>
    %14 = arith.divf %12, %13 : vector<8x1xf32>
    %15 = vector.broadcast %7 : vector<8x1xf32> to vector<8x32xf32>
    %16 = arith.subf %1, %15 : vector<8x32xf32>
    %cst_9 = arith.constant 9.99999974E-6 : f32
    %17 = vector.broadcast %cst_9 : f32 to vector<8x1xf32>
    %18 = arith.addf %14, %17 : vector<8x1xf32>
    %19 = math.rsqrt %18 : vector<8x1xf32>
    %20 = vector.broadcast %19 : vector<8x1xf32> to vector<8x32xf32>
    %21 = arith.mulf %16, %20 : vector<8x32xf32>
    %22 = vector.broadcast %2 : vector<1x32xf32> to vector<8x32xf32>
    %23 = arith.mulf %21, %22 : vector<8x32xf32>
    %24 = vector.broadcast %3 : vector<1x32xf32> to vector<8x32xf32>
    %25 = arith.addf %23, %24 : vector<8x32xf32>
    %26 = arith.truncf %25 : vector<8x32xf32> to vector<8x32xbf16>
    %c0_10 = arith.constant 0 : index
    %c0_11 = arith.constant 0 : index
    %27 = vector.load %arg4[%c0_10, %c0_11] : memref<32x96xbf16, #tpu.memory_space<vmem>>, vector<32x96xbf16>
    %cst_12 = arith.constant dense<0.000000e+00> : vector<8x96xf32>
    %28 = tpu.matmul %26, %27, %cst_12 {dimension_numbers = #tpu.dot_dimension_numbers<[1], [0], [0], [1], [0, 0, 1, 1], [], []>} : vector<8x32xbf16>, vector<32x96xbf16>, vector<8x96xf32> -> vector<8x96xf32>
    %c0_13 = arith.constant 0 : index
    %c0_14 = arith.constant 0 : index
    %29 = vector.load %arg5[%c0_13, %c0_14] : memref<1x96xf32, #tpu.memory_space<vmem>>, vector<1x96xf32>
    %30 = vector.broadcast %29 : vector<1x96xf32> to vector<8x96xf32>
    %31 = arith.addf %28, %30 : vector<8x96xf32>
    %32 = vector.extract_strided_slice %31 {offsets = [0, 0], sizes = [8, 32], strides = [1, 1]} : vector<8x96xf32> to vector<8x32xf32>
    %33 = vector.shape_cast %32 : vector<8x32xf32> to vector<8x4x8xf32>
    %34 = tpu.transpose %33, [1, 0, 2] : vector<8x4x8xf32> -> vector<4x8x8xf32>
    %35 = arith.truncf %34 : vector<4x8x8xf32> to vector<4x8x8xbf16>
    %36 = vector.extract_strided_slice %31 {offsets = [0, 32], sizes = [8, 32], strides = [1, 1]} : vector<8x96xf32> to vector<8x32xf32>
    %37 = vector.shape_cast %36 : vector<8x32xf32> to vector<8x4x8xf32>
    %38 = tpu.transpose %37, [1, 0, 2] : vector<8x4x8xf32> -> vector<4x8x8xf32>
    %39 = arith.truncf %38 : vector<4x8x8xf32> to vector<4x8x8xbf16>
    %40 = vector.extract_strided_slice %31 {offsets = [0, 64], sizes = [8, 32], strides = [1, 1]} : vector<8x96xf32> to vector<8x32xf32>
    %41 = vector.shape_cast %40 : vector<8x32xf32> to vector<8x4x8xf32>
    %42 = tpu.transpose %41, [1, 0, 2] : vector<8x4x8xf32> -> vector<4x8x8xf32>
    %43 = arith.truncf %42 : vector<4x8x8xf32> to vector<4x8x8xbf16>
    "tpu.trace_start"() <{level = 10 : i32, message = "hqd,hkd->hqk"}> : () -> ()
    %cst_15 = arith.constant dense<0.000000e+00> : vector<4x8x8xf32>
    %44 = tpu.matmul %35, %39, %cst_15 {dimension_numbers = #tpu.dot_dimension_numbers<[2], [2], [1], [1], [0, 0, 0, 1, 1, 1], [0], [0]>} : vector<4x8x8xbf16>, vector<4x8x8xbf16>, vector<4x8x8xf32> -> vector<4x8x8xf32>
    "tpu.trace_stop"() : () -> ()
    %cst_16 = arith.constant 0.353553385 : f32
    %45 = vector.broadcast %cst_16 : f32 to vector<4x8x8xf32>
    %46 = arith.mulf %44, %45 : vector<4x8x8xf32>
    %47 = tpu.iota {dimensions = array<i32: 2>} : vector<1x1x8xi32>
    %c5_i32 = arith.constant 5 : i32
    %48 = vector.broadcast %c5_i32 : i32 to vector<1x1x8xi32>
    %49 = arith.cmpi slt, %47, %48 : vector<1x1x8xi32>
    %cst_17 = arith.constant -1.000000e+30 : f32
    %50 = vector.shape_cast %49 : vector<1x1x8xi1> to vector<1x1x8xi1>
    %51 = vector.broadcast %50 : vector<1x1x8xi1> to vector<4x8x8xi1>
    %52 = vector.broadcast %cst_17 : f32 to vector<4x8x8xf32>
    %53 = arith.select %51, %46, %52 : vector<4x8x8xi1>, vector<4x8x8xf32>
    %cst_18 = arith.constant dense<0xFF800000> : vector<4x8xf32>
    %54 = vector.multi_reduction <maximumf>, %53, %cst_18 [2] : vector<4x8x8xf32> to vector<4x8xf32>
    %55 = vector.shape_cast %54 : vector<4x8xf32> to vector<4x8x1xf32>
    %56 = vector.broadcast %55 : vector<4x8x1xf32> to vector<4x8x8xf32>
    %57 = arith.subf %53, %56 : vector<4x8x8xf32>
    %58 = math.exp %57 : vector<4x8x8xf32>
    %cst_19 = arith.constant dense<0.000000e+00> : vector<4x8xf32>
    %59 = vector.multi_reduction <add>, %58, %cst_19 [2] : vector<4x8x8xf32> to vector<4x8xf32>
    %60 = vector.shape_cast %59 : vector<4x8xf32> to vector<4x8x1xf32>
    %61 = tpu.reciprocal %60 {approx = true} : vector<4x8x1xf32> -> vector<4x8x1xf32>
    %62 = vector.broadcast %61 : vector<4x8x1xf32> to vector<4x8x8xf32>
    %63 = arith.mulf %58, %62 : vector<4x8x8xf32>
    %64 = arith.truncf %63 : vector<4x8x8xf32> to vector<4x8x8xbf16>
    "tpu.trace_start"() <{level = 10 : i32, message = "hqk,hkd->hqd"}> : () -> ()
    %cst_20 = arith.constant dense<0.000000e+00> : vector<4x8x8xf32>
    %65 = tpu.matmul %64, %43, %cst_20 {dimension_numbers = #tpu.dot_dimension_numbers<[2], [1], [1], [2], [0, 0, 0, 1, 1, 2], [0], [0]>} : vector<4x8x8xbf16>, vector<4x8x8xbf16>, vector<4x8x8xf32> -> vector<4x8x8xf32>
    "tpu.trace_stop"() : () -> ()
    %66 = tpu.transpose %65, [1, 0, 2] : vector<4x8x8xf32> -> vector<8x4x8xf32>
    %67 = vector.shape_cast %66 : vector<8x4x8xf32> to vector<8x32xf32>
    %68 = arith.truncf %67 : vector<8x32xf32> to vector<8x32xbf16>
    %c0_21 = arith.constant 0 : index
    %c0_22 = arith.constant 0 : index
    %69 = vector.load %arg6[%c0_21, %c0_22] : memref<32x32xbf16, #tpu.memory_space<vmem>>, vector<32x32xbf16>
    %cst_23 = arith.constant dense<0.000000e+00> : vector<8x32xf32>
    %70 = tpu.matmul %68, %69, %cst_23 {dimension_numbers = #tpu.dot_dimension_numbers<[1], [0], [0], [1], [0, 0, 1, 1], [], []>} : vector<8x32xbf16>, vector<32x32xbf16>, vector<8x32xf32> -> vector<8x32xf32>
    %c0_24 = arith.constant 0 : index
    %c0_25 = arith.constant 0 : index
    %71 = vector.load %arg7[%c0_24, %c0_25] : memref<1x32xf32, #tpu.memory_space<vmem>>, vector<1x32xf32>
    %72 = vector.broadcast %71 : vector<1x32xf32> to vector<8x32xf32>
    %73 = arith.addf %70, %72 : vector<8x32xf32>
    %74 = arith.addf %1, %73 : vector<8x32xf32>
    %c0_26 = arith.constant 0 : index
    %c0_27 = arith.constant 0 : index
    %75 = vector.load %arg8[%c0_26, %c0_27] : memref<1x32xf32, #tpu.memory_space<vmem>>, vector<1x32xf32>
    %c0_28 = arith.constant 0 : index
    %c0_29 = arith.constant 0 : index
    %76 = vector.load %arg9[%c0_28, %c0_29] : memref<1x32xf32, #tpu.memory_space<vmem>>, vector<1x32xf32>
    %cst_30 = arith.constant dense<0.000000e+00> : vector<8xf32>
    %77 = vector.multi_reduction <add>, %74, %cst_30 [1] : vector<8x32xf32> to vector<8xf32>
    %78 = vector.shape_cast %77 : vector<8xf32> to vector<8x1xf32>
    %cst_31 = arith.constant 3.200000e+01 : f32
    %79 = vector.broadcast %cst_31 : f32 to vector<8x1xf32>
    %80 = arith.divf %78, %79 : vector<8x1xf32>
    %81 = vector.broadcast %80 : vector<8x1xf32> to vector<8x32xf32>
    %82 = arith.subf %74, %81 : vector<8x32xf32>
    %83 = arith.mulf %82, %82 : vector<8x32xf32>
    %cst_32 = arith.constant dense<0.000000e+00> : vector<8xf32>
    %84 = vector.multi_reduction <add>, %83, %cst_32 [1] : vector<8x32xf32> to vector<8xf32>
    %85 = vector.shape_cast %84 : vector<8xf32> to vector<8x1xf32>
    %cst_33 = arith.constant 3.200000e+01 : f32
    %86 = vector.broadcast %cst_33 : f32 to vector<8x1xf32>
    %87 = arith.divf %85, %86 : vector<8x1xf32>
    %88 = vector.broadcast %80 : vector<8x1xf32> to vector<8x32xf32>
    %89 = arith.subf %74, %88 : vector<8x32xf32>
    %cst_34 = arith.constant 9.99999974E-6 : f32
    %90 = vector.broadcast %cst_34 : f32 to vector<8x1xf32>
    %91 = arith.addf %87, %90 : vector<8x1xf32>
    %92 = math.rsqrt %91 : vector<8x1xf32>
    %93 = vector.broadcast %92 : vector<8x1xf32> to vector<8x32xf32>
    %94 = arith.mulf %89, %93 : vector<8x32xf32>
    %95 = vector.broadcast %75 : vector<1x32xf32> to vector<8x32xf32>
    %96 = arith.mulf %94, %95 : vector<8x32xf32>
    %97 = vector.broadcast %76 : vector<1x32xf32> to vector<8x32xf32>
    %98 = arith.addf %96, %97 : vector<8x32xf32>
    %99 = arith.truncf %98 : vector<8x32xf32> to vector<8x32xbf16>
    %c0_35 = arith.constant 0 : index
    %c0_36 = arith.constant 0 : index
    %100 = vector.load %arg10[%c0_35, %c0_36] : memref<32x128xbf16, #tpu.memory_space<vmem>>, vector<32x128xbf16>
    %cst_37 = arith.constant dense<0.000000e+00> : vector<8x128xf32>
    %101 = tpu.matmul %99, %100, %cst_37 {dimension_numbers = #tpu.dot_dimension_numbers<[1], [0], [0], [1], [0, 0, 1, 1], [], []>} : vector<8x32xbf16>, vector<32x128xbf16>, vector<8x128xf32> -> vector<8x128xf32>
    %c0_38 = arith.constant 0 : index
    %c0_39 = arith.constant 0 : index
    %102 = vector.load %arg11[%c0_38, %c0_39] : memref<1x128xf32, #tpu.memory_space<vmem>>, vector<1x128xf32>
    %103 = vector.broadcast %102 : vector<1x128xf32> to vector<8x128xf32>
    %104 = arith.addf %101, %103 : vector<8x128xf32>
    %cst_40 = arith.constant 5.000000e-01 : f32
    %105 = vector.broadcast %cst_40 : f32 to vector<8x128xf32>
    %106 = arith.mulf %105, %104 : vector<8x128xf32>
    %cst_41 = arith.constant 4.471500e-02 : f32
    %107 = vector.broadcast %cst_41 : f32 to vector<8x128xf32>
    %108 = arith.mulf %107, %104 : vector<8x128xf32>
    %109 = arith.mulf %108, %104 : vector<8x128xf32>
    %110 = arith.mulf %109, %104 : vector<8x128xf32>
    %111 = arith.addf %104, %110 : vector<8x128xf32>
    %cst_42 = arith.constant 0.797884583 : f32
    %112 = vector.broadcast %cst_42 : f32 to vector<8x128xf32>
    %113 = arith.mulf %112, %111 : vector<8x128xf32>
    %114 = math.tanh %113 : vector<8x128xf32>
    %cst_43 = arith.constant 1.000000e+00 : f32
    %115 = vector.broadcast %cst_43 : f32 to vector<8x128xf32>
    %116 = arith.addf %115, %114 : vector<8x128xf32>
    %117 = arith.mulf %106, %116 : vector<8x128xf32>
    %118 = arith.truncf %117 : vector<8x128xf32> to vector<8x128xbf16>
    %c0_44 = arith.constant 0 : index
    %c0_45 = arith.constant 0 : index
    %119 = vector.load %arg12[%c0_44, %c0_45] : memref<128x32xbf16, #tpu.memory_space<vmem>>, vector<128x32xbf16>
    %cst_46 = arith.constant dense<0.000000e+00> : vector<8x32xf32>
    %120 = tpu.matmul %118, %119, %cst_46 {dimension_numbers = #tpu.dot_dimension_numbers<[1], [0], [0], [1], [0, 0, 1, 1], [], []>} : vector<8x128xbf16>, vector<128x32xbf16>, vector<8x32xf32> -> vector<8x32xf32>
    %c0_47 = arith.constant 0 : index
    %c0_48 = arith.constant 0 : index
    %121 = vector.load %arg13[%c0_47, %c0_48] : memref<1x32xf32, #tpu.memory_space<vmem>>, vector<1x32xf32>
    %122 = vector.broadcast %121 : vector<1x32xf32> to vector<8x32xf32>
    %123 = arith.addf %120, %122 : vector<8x32xf32>
    %124 = arith.addf %74, %123 : vector<8x32xf32>
    %c0_49 = arith.constant 0 : index
    %c0_50 = arith.constant 0 : index
    %c0_51 = arith.constant 0 : index
    %125 = vector.load %arg14[%c0_49, %c0_50, %c0_51] : memref<1x8x32xf32, #tpu.memory_space<vmem>>, vector<1x8x32xf32>
    %126 = vector.shape_cast %125 : vector<1x8x32xf32> to vector<8x32xf32>
    %127 = vector.shape_cast %124 : vector<8x32xf32> to vector<1x8x32xf32>
    tpu.vector_store %arg14[%c0_49, %c0_50, %c0_51], %127 {strides = array<i32>} : memref<1x8x32xf32, #tpu.memory_space<vmem>>, vector<1x8x32xf32>,
    return
  }
  func.func @transform_0(%arg0: i32) -> (i32, i32, i32) {
    %c0_i32 = arith.constant 0 : i32
    %c0_i32_0 = arith.constant 0 : i32
    %c0_i32_1 = arith.constant 0 : i32
    return %arg0, %c0_i32, %c0_i32_0 : i32, i32, i32
  }
  func.func @transform_1(%arg0: i32) -> (i32, i32) {
    %c0_i32 = arith.constant 0 : i32
    %c0_i32_0 = arith.constant 0 : i32
    %c0_i32_1 = arith.constant 0 : i32
    return %c0_i32, %c0_i32_0 : i32, i32
  }
  func.func @transform_2(%arg0: i32) -> (i32, i32) {
    %c0_i32 = arith.constant 0 : i32
    %c0_i32_0 = arith.constant 0 : i32
    %c0_i32_1 = arith.constant 0 : i32
    return %c0_i32, %c0_i32_0 : i32, i32
  }
  func.func @transform_3(%arg0: i32) -> (i32, i32) {
    %c0_i32 = arith.constant 0 : i32
    %c0_i32_0 = arith.constant 0 : i32
    %c0_i32_1 = arith.constant 0 : i32
    return %c0_i32, %c0_i32_0 : i32, i32
  }
  func.func @transform_4(%arg0: i32) -> (i32, i32) {
    %c0_i32 = arith.constant 0 : i32
    %c0_i32_0 = arith.constant 0 : i32
    %c0_i32_1 = arith.constant 0 : i32
    return %c0_i32, %c0_i32_0 : i32, i32
  }
  func.func @transform_5(%arg0: i32) -> (i32, i32) {
    %c0_i32 = arith.constant 0 : i32
    %c0_i32_0 = arith.constant 0 : i32
    %c0_i32_1 = arith.constant 0 : i32
    return %c0_i32, %c0_i32_0 : i32, i32
  }
  func.func @transform_6(%arg0: i32) -> (i32, i32) {
    %c0_i32 = arith.constant 0 : i32
    %c0_i32_0 = arith.constant 0 : i32
    %c0_i32_1 = arith.constant 0 : i32
    return %c0_i32, %c0_i32_0 : i32, i32
  }
  func.func @transform_7(%arg0: i32) -> (i32, i32) {
    %c0_i32 = arith.constant 0 : i32
    %c0_i32_0 = arith.constant 0 : i32
    %c0_i32_1 = arith.constant 0 : i32
    return %c0_i32, %c0_i32_0 : i32, i32
  }
  func.func @transform_8(%arg0: i32) -> (i32, i32) {
    %c0_i32 = arith.constant 0 : i32
    %c0_i32_0 = arith.constant 0 : i32
    %c0_i32_1 = arith.constant 0 : i32
    return %c0_i32, %c0_i32_0 : i32, i32
  }
  func.func @transform_9(%arg0: i32) -> (i32, i32) {
    %c0_i32 = arith.constant 0 : i32
    %c0_i32_0 = arith.constant 0 : i32
    %c0_i32_1 = arith.constant 0 : i32
    return %c0_i32, %c0_i32_0 : i32, i32
  }
  func.func @transform_10(%arg0: i32) -> (i32, i32) {
    %c0_i32 = arith.constant 0 : i32
    %c0_i32_0 = arith.constant 0 : i32
    %c0_i32_1 = arith.constant 0 : i32
    return %c0_i32, %c0_i32_0 : i32, i32
  }
  func.func @transform_11(%arg0: i32) -> (i32, i32) {
    %c0_i32 = arith.constant 0 : i32
    %c0_i32_0 = arith.constant 0 : i32
    %c0_i32_1 = arith.constant 0 : i32
    return %c0_i32, %c0_i32_0 : i32, i32
  }
  func.func @transform_12(%arg0: i32) -> (i32, i32) {
    %c0_i32 = arith.constant 0 : i32
    %c0_i32_0 = arith.constant 0 : i32
    %c0_i32_1 = arith.constant 0 : i32
    return %c0_i32, %c0_i32_0 : i32, i32
  }
  func.func @transform_13(%arg0: i32) -> (i32, i32, i32) {
    %c0_i32 = arith.constant 0 : i32
    %c0_i32_0 = arith.constant 0 : i32
    %c0_i32_1 = arith.constant 0 : i32
    return %arg0, %c0_i32, %c0_i32_0 : i32, i32, i32
  }
}

module attributes {stable_mosaic.version = 11 : i64} {
  func.func @head_kernel(%arg0: i32, %arg1: memref<2x32xf32, #tpu.memory_space<vmem>>, %arg2: memref<32x64xbf16, #tpu.memory_space<vmem>>, %arg3: memref<1x64xf32, #tpu.memory_space<vmem>>, %arg4: memref<64x10xbf16, #tpu.memory_space<vmem>>, %arg5: memref<1x10xf32, #tpu.memory_space<vmem>>, %arg6: memref<2x10xf32, #tpu.memory_space<vmem>>) attributes {dimension_semantics = [#tpu.dimension_semantics<arbitrary>], iteration_bounds = array<i64: 1>, scalar_prefetch = 0 : i64, scratch_operands = 0 : i64, tpu.core_type = #tpu.core_type<tc>, window_params = [{pipeline_mode = #tpu.pipeline_mode<synchronous>, transform_indices = @transform_0, window_bounds = array<i64: 2, 32>}, {pipeline_mode = #tpu.pipeline_mode<synchronous>, transform_indices = @transform_1, window_bounds = array<i64: 32, 64>}, {pipeline_mode = #tpu.pipeline_mode<synchronous>, transform_indices = @transform_2, window_bounds = array<i64: 1, 64>}, {pipeline_mode = #tpu.pipeline_mode<synchronous>, transform_indices = @transform_3, window_bounds = array<i64: 64, 10>}, {pipeline_mode = #tpu.pipeline_mode<synchronous>, transform_indices = @transform_4, window_bounds = array<i64: 1, 10>}, {pipeline_mode = #tpu.pipeline_mode<synchronous>, transform_indices = @transform_5, window_bounds = array<i64: 2, 10>}]} {
    %c0 = arith.constant 0 : index
    %c0_0 = arith.constant 0 : index
    %0 = vector.load %arg1[%c0, %c0_0] : memref<2x32xf32, #tpu.memory_space<vmem>>, vector<2x32xf32>
    %1 = arith.truncf %0 : vector<2x32xf32> to vector<2x32xbf16>
    %c0_1 = arith.constant 0 : index
    %c0_2 = arith.constant 0 : index
    %2 = vector.load %arg2[%c0_1, %c0_2] : memref<32x64xbf16, #tpu.memory_space<vmem>>, vector<32x64xbf16>
    %cst = arith.constant dense<0.000000e+00> : vector<2x64xf32>
    %3 = tpu.matmul %1, %2, %cst {dimension_numbers = #tpu.dot_dimension_numbers<[1], [0], [0], [1], [0, 0, 1, 1], [], []>} : vector<2x32xbf16>, vector<32x64xbf16>, vector<2x64xf32> -> vector<2x64xf32>
    %c0_3 = arith.constant 0 : index
    %c0_4 = arith.constant 0 : index
    %4 = vector.load %arg3[%c0_3, %c0_4] : memref<1x64xf32, #tpu.memory_space<vmem>>, vector<1x64xf32>
    %5 = vector.broadcast %4 : vector<1x64xf32> to vector<2x64xf32>
    %6 = arith.addf %3, %5 : vector<2x64xf32>
    %cst_5 = arith.constant 5.000000e-01 : f32
    %7 = vector.broadcast %cst_5 : f32 to vector<2x64xf32>
    %8 = arith.mulf %7, %6 : vector<2x64xf32>
    %cst_6 = arith.constant 4.471500e-02 : f32
    %9 = vector.broadcast %cst_6 : f32 to vector<2x64xf32>
    %10 = arith.mulf %9, %6 : vector<2x64xf32>
    %11 = arith.mulf %10, %6 : vector<2x64xf32>
    %12 = arith.mulf %11, %6 : vector<2x64xf32>
    %13 = arith.addf %6, %12 : vector<2x64xf32>
    %cst_7 = arith.constant 0.797884583 : f32
    %14 = vector.broadcast %cst_7 : f32 to vector<2x64xf32>
    %15 = arith.mulf %14, %13 : vector<2x64xf32>
    %16 = math.tanh %15 : vector<2x64xf32>
    %cst_8 = arith.constant 1.000000e+00 : f32
    %17 = vector.broadcast %cst_8 : f32 to vector<2x64xf32>
    %18 = arith.addf %17, %16 : vector<2x64xf32>
    %19 = arith.mulf %8, %18 : vector<2x64xf32>
    %20 = arith.truncf %19 : vector<2x64xf32> to vector<2x64xbf16>
    %c0_9 = arith.constant 0 : index
    %c0_10 = arith.constant 0 : index
    %21 = vector.load %arg4[%c0_9, %c0_10] : memref<64x10xbf16, #tpu.memory_space<vmem>>, vector<64x10xbf16>
    %cst_11 = arith.constant dense<0.000000e+00> : vector<2x10xf32>
    %22 = tpu.matmul %20, %21, %cst_11 {dimension_numbers = #tpu.dot_dimension_numbers<[1], [0], [0], [1], [0, 0, 1, 1], [], []>} : vector<2x64xbf16>, vector<64x10xbf16>, vector<2x10xf32> -> vector<2x10xf32>
    %c0_12 = arith.constant 0 : index
    %c0_13 = arith.constant 0 : index
    %23 = vector.load %arg5[%c0_12, %c0_13] : memref<1x10xf32, #tpu.memory_space<vmem>>, vector<1x10xf32>
    %24 = vector.broadcast %23 : vector<1x10xf32> to vector<2x10xf32>
    %25 = arith.addf %22, %24 : vector<2x10xf32>
    %c0_14 = arith.constant 0 : index
    %c0_15 = arith.constant 0 : index
    %26 = vector.load %arg6[%c0_14, %c0_15] : memref<2x10xf32, #tpu.memory_space<vmem>>, vector<2x10xf32>
    tpu.vector_store %arg6[%c0_14, %c0_15], %25 {strides = array<i32>} : memref<2x10xf32, #tpu.memory_space<vmem>>, vector<2x10xf32>,
    return
  }
  func.func @transform_0(%arg0: i32) -> (i32, i32) {
    %c0_i32 = arith.constant 0 : i32
    %c0_i32_0 = arith.constant 0 : i32
    %c0_i32_1 = arith.constant 0 : i32
    return %c0_i32, %c0_i32_0 : i32, i32
  }
  func.func @transform_1(%arg0: i32) -> (i32, i32) {
    %c0_i32 = arith.constant 0 : i32
    %c0_i32_0 = arith.constant 0 : i32
    %c0_i32_1 = arith.constant 0 : i32
    return %c0_i32, %c0_i32_0 : i32, i32
  }
  func.func @transform_2(%arg0: i32) -> (i32, i32) {
    %c0_i32 = arith.constant 0 : i32
    %c0_i32_0 = arith.constant 0 : i32
    %c0_i32_1 = arith.constant 0 : i32
    return %c0_i32, %c0_i32_0 : i32, i32
  }
  func.func @transform_3(%arg0: i32) -> (i32, i32) {
    %c0_i32 = arith.constant 0 : i32
    %c0_i32_0 = arith.constant 0 : i32
    %c0_i32_1 = arith.constant 0 : i32
    return %c0_i32, %c0_i32_0 : i32, i32
  }
  func.func @transform_4(%arg0: i32) -> (i32, i32) {
    %c0_i32 = arith.constant 0 : i32
    %c0_i32_0 = arith.constant 0 : i32
    %c0_i32_1 = arith.constant 0 : i32
    return %c0_i32, %c0_i32_0 : i32, i32
  }
  func.func @transform_5(%arg0: i32) -> (i32, i32) {
    %c0_i32 = arith.constant 0 : i32
    %c0_i32_0 = arith.constant 0 : i32
    %c0_i32_1 = arith.constant 0 : i32
    return %c0_i32, %c0_i32_0 : i32, i32
  }
}

</mosaic_0001>

<llo_original>
// kernel: _lambda_.4
$region0: #{_lambda_.4}
  #allocation0 [shape = 'u32[]', space=smem, size = 0x4, offset = 0x4, fixed_abs, tag = 'smem constant byte address 0x4 - core index']
  #allocation1 [shape = 'u32[72,128]{1,0:T(1,128)}', space=vmem, size = 0x9000, scoped, tag = 'internal scratch']
  %s0 = inlined_call_operand.vmem [shape: f32[2,8,256], index: 0, kind: input, shape index: {}]
  %s1 = inlined_call_operand.vmem [shape: bf16[256,32], index: 1, kind: input, shape index: {}]
  %s2 = inlined_call_operand.vmem [shape: f32[1,32], index: 2, kind: input, shape index: {}]
  %s3 = inlined_call_operand.vmem [shape: f32[8,32], index: 3, kind: input, shape index: {}]
  %s4 = inlined_call_operand.vmem [shape: f32[2,8,32], index: 4, kind: output, shape index: {}]
  %s5 = sld [smem:[#allocation0]]
  $region49: #{_lambda_.4} parent=0
    _
  %s7 = ssub.s32 1, %s5
  %s8 = scalar_select 0, %s7, %s5
  loop: start=0, step=1, limit=4
  $region2: #{_lambda_.4} parent=0 // loop_pre_header
    _
  $region3: #{_lambda_.4} parent=0 // loop_header
    %s10 = sphi 0, %s14
    %p11 = scmp.ge.s32.totalorder %s10, 4
    %s20 = sphi 0, %s22
    %s23 = sphi 0, %s20
    %s24 = sphi 0, %s23
    %s40 = sphi 0, %s24
    %s44 = sphi 0, %s44
    %s46 = sphi 0, %s44
    %s47 = sphi 0, %s46
    %s61 = sphi 0, %s47
    %s65 = sphi 0, %s65
    %s67 = sphi 0, %s65
    %s68 = sphi 0, %s67
    %s82 = sphi 0, %s68
    %s86 = sphi 0, %s86
    %s88 = sphi 0, %s86
    %s89 = sphi 0, %s88
    %s103 = sphi 0, %s89
    %s109 = sphi 0, %s111
    %s112 = sphi 0, %s109
    %s113 = sphi 0, %s112
    %s129 = sphi 0, %s113
  $region4: #{_lambda_.4} parent=0 // loop_header_branch
    %13 = sbr.rel (%p11) target = $region8
  $region5: #{_lambda_.4} parent=0 // loop_body
    %s15 = ssub.s32 %s10, 1
    %s16 = ssub.s32 %s10, 2
    %s17 = sadd.s32 %s10, 1
    %s18 = ssub.s32 %s10, %s17
    %p19 = scmp.eq.s32.totalorder %s18, 0
    %s21 = sadd.s32 %s20, 1
    %s22 = scalar_select %p19, %s20, %s21
    %p25 = pneg %p19
    %p26 = scmp.eq.s32.totalorder %s10, 1
    %p27 = por %p25, %p26
    %p28 = scmp.ne.s32.totalorder %s20, %s23
    %p29 = scmp.eq.s32.totalorder %s10, 0
    %p30 = por %p28, %p29
    %p31 = scmp.ne.s32.totalorder %s20, %s23
    %p32 = scmp.eq.s32.totalorder %s15, 1
    %p33 = por %p31, %p32
    %p34 = scmp.ne.s32.totalorder %s23, %s24
    %p35 = scmp.eq.s32.totalorder %s15, 0
    %p36 = por %p34, %p35
    %p37 = scmp.ne.s32.totalorder %s23, %s24
    %p38 = scmp.eq.s32.totalorder %s16, 1
    %p39 = por %p37, %p38
    %p41 = scmp.ne.s32.totalorder %s24, %s40
    %p42 = scmp.eq.s32.totalorder %s16, 0
    %p43 = por %p41, %p42
    %s45 = sadd.s32 %s44, 1
    %p48 = scmp.eq.s32.totalorder %s10, 1
    %p49 = scmp.ne.s32.totalorder %s44, %s46
    %p50 = scmp.eq.s32.totalorder %s10, 0
    %p51 = por %p49, %p50
    %p52 = scmp.ne.s32.totalorder %s44, %s46
    %p53 = scmp.eq.s32.totalorder %s15, 1
    %p54 = por %p52, %p53
    %p55 = scmp.ne.s32.totalorder %s46, %s47
    %p56 = scmp.eq.s32.totalorder %s15, 0
    %p57 = por %p55, %p56
    %p58 = scmp.ne.s32.totalorder %s46, %s47
    %p59 = scmp.eq.s32.totalorder %s16, 1
    %p60 = por %p58, %p59
    %p62 = scmp.ne.s32.totalorder %s47, %s61
    %p63 = scmp.eq.s32.totalorder %s16, 0
    %p64 = por %p62, %p63
    %s66 = sadd.s32 %s65, 1
    %p69 = scmp.eq.s32.totalorder %s10, 1
    %p70 = scmp.ne.s32.totalorder %s65, %s67
    %p71 = scmp.eq.s32.totalorder %s10, 0
    %p72 = por %p70, %p71
    %p73 = scmp.ne.s32.totalorder %s65, %s67
    %p74 = scmp.eq.s32.totalorder %s15, 1
    %p75 = por %p73, %p74
    %p76 = scmp.ne.s32.totalorder %s67, %s68
    %p77 = scmp.eq.s32.totalorder %s15, 0
    %p78 = por %p76, %p77
    %p79 = scmp.ne.s32.totalorder %s67, %s68
    %p80 = scmp.eq.s32.totalorder %s16, 1
    %p81 = por %p79, %p80
    %p83 = scmp.ne.s32.totalorder %s68, %s82
    %p84 = scmp.eq.s32.totalorder %s16, 0
    %p85 = por %p83, %p84
    %s87 = sadd.s32 %s86, 1
    %p90 = scmp.eq.s32.totalorder %s10, 1
    %p91 = scmp.ne.s32.totalorder %s86, %s88
    %p92 = scmp.eq.s32.totalorder %s10, 0
    %p93 = por %p91, %p92
    %p94 = scmp.ne.s32.totalorder %s86, %s88
    %p95 = scmp.eq.s32.totalorder %s15, 1
    %p96 = por %p94, %p95
    %p97 = scmp.ne.s32.totalorder %s88, %s89
    %p98 = scmp.eq.s32.totalorder %s15, 0
    %p99 = por %p97, %p98
    %p100 = scmp.ne.s32.totalorder %s88, %s89
    %p101 = scmp.eq.s32.totalorder %s16, 1
    %p102 = por %p100, %p101
    %p104 = scmp.ne.s32.totalorder %s89, %s103
    %p105 = scmp.eq.s32.totalorder %s16, 0
    %p106 = por %p104, %p105
    %s107 = ssub.s32 %s10, %s17
    %p108 = scmp.eq.s32.totalorder %s107, 0
    %s110 = sadd.s32 %s109, 1
    %s111 = scalar_select %p108, %s109, %s110
    %p114 = pneg %p108
    %p115 = scmp.eq.s32.totalorder %s10, 1
    %p116 = por %p114, %p115
    %p117 = scmp.ne.s32.totalorder %s109, %s112
    %p118 = scmp.eq.s32.totalorder %s10, 0
    %p119 = por %p117, %p118
    %p120 = scmp.ne.s32.totalorder %s109, %s112
    %p121 = scmp.eq.s32.totalorder %s15, 1
    %p122 = por %p120, %p121
    %p123 = scmp.ne.s32.totalorder %s112, %s113
    %p124 = scmp.eq.s32.totalorder %s15, 0
    %p125 = por %p123, %p124
    %p126 = scmp.ne.s32.totalorder %s112, %s113
    %p127 = scmp.eq.s32.totalorder %s16, 1
    %p128 = por %p126, %p127
    %p130 = scmp.ne.s32.totalorder %s113, %s129
    %p131 = scmp.eq.s32.totalorder %s16, 0
    %p132 = por %p130, %p131
    %p133 = scmp.le.s32.totalorder 1, %s10
    %p134 = scmp.lt.s32.totalorder %s10, 3
    %p135 = pnand %p133, %p134
    %p136 = pneg %p135
    // Predicated region
    $region9: #{_lambda_.4} parent=5 // pred_check
      _
    $region10: #{_lambda_.4} parent=5 // pred_check_branch
      %138 = sbr.rel (%p135) target = $region12
    $region11: #{_lambda_.4} parent=5 // pred_region
      %s139 = ssub.s32 %s10, 1
      // Predicated region
      $region13: #{_lambda_.4} parent=11 // pred_check
        %p140 = pneg %p57
      $region14: #{_lambda_.4} parent=11 // pred_check_branch
        %142 = sbr.rel (%p140) target = $region16
      $region15: #{_lambda_.4} parent=11 // pred_region
        _
      $region16: #{_lambda_.4} parent=11 // pred_fallthru
        _
      // Predicated region
      $region17: #{_lambda_.4} parent=11 // pred_check
        %p143 = pneg %p78
      $region18: #{_lambda_.4} parent=11 // pred_check_branch
        %145 = sbr.rel (%p143) target = $region20
      $region19: #{_lambda_.4} parent=11 // pred_region
        _
      $region20: #{_lambda_.4} parent=11 // pred_fallthru
        _
      // Predicated region
      $region21: #{_lambda_.4} parent=11 // pred_check
        %p146 = pneg %p99
      $region22: #{_lambda_.4} parent=11 // pred_check_branch
        %148 = sbr.rel (%p146) target = $region24
      $region23: #{_lambda_.4} parent=11 // pred_region
        _
      $region24: #{_lambda_.4} parent=11 // pred_fallthru
        _
    $region12: #{_lambda_.4} parent=5 // pred_fallthru
      _
    %p149 = scmp.lt.s32.totalorder %s10, 2
    // Predicated region
    $region25: #{_lambda_.4} parent=5 // pred_check
      %p150 = pneg %p149
    $region26: #{_lambda_.4} parent=5 // pred_check_branch
      %152 = sbr.rel (%p150) target = $region28
    $region27: #{_lambda_.4} parent=5 // pred_region
      // Predicated region
      $region29: #{_lambda_.4} parent=27 // pred_check
        %p153 = pneg %p30
      $region30: #{_lambda_.4} parent=27 // pred_check_branch
        %155 = sbr.rel (%p153) target = $region32
      $region31: #{_lambda_.4} parent=27 // pred_region
        %p156 = scmp.lt.s32.totalorder %s10, 1
        %s157 = scalar_select %p156, %s10, 1
        %s158 = smul.addr %s157, 2
        %s159 = smul.addr %s158, 8
        %s160 = scalar_lea.vmem %s0, %s159
      $region32: #{_lambda_.4} parent=27 // pred_fallthru
        _
    $region28: #{_lambda_.4} parent=5 // pred_fallthru
      _
    %p161 = scmp.le.s32.totalorder 1, %s10
    %p162 = scmp.lt.s32.totalorder %s10, 3
    %p163 = pnand %p161, %p162
    %p164 = pneg %p163
    // Predicated region
    $region33: #{_lambda_.4} parent=5 // pred_check
      _
    $region34: #{_lambda_.4} parent=5 // pred_check_branch
      %166 = sbr.rel (%p163) target = $region36
    $region35: #{_lambda_.4} parent=5 // pred_region
      %s167 = ssub.s32 %s10, 1
      %p168 = scmp.lt.s32.totalorder %s15, 1
      %s169 = scalar_select %p168, %s15, 1
      %s170 = smul.addr %s169, 2
      %s171 = smul.addr %s170, 8
      %s172 = scalar_lea.vmem %s0, %s171
      %p173 = pneg %p36
      %p174 = pneg %p33
      %p175 = pneg %p57
      %p176 = pneg %p54
      %p177 = pneg %p78
      %p178 = pneg %p75
      %p179 = pneg %p99
      %p180 = pneg %p96
      %p181 = pneg %p125
      %p182 = pneg %p122
      %p183 = scmp.lt.s32.totalorder %s15, 1
      %s184 = scalar_select %p183, %s15, 1
      %s185 = smul.addr %s184, 8
      %s186 = scalar_lea.vmem %s4, %s185
      %p187 = scmp.lt.s32.totalorder %s15, 1
      %s188 = scalar_select %p187, %s15, 1
      %s189 = smul.addr %s188, 2
      %s190 = smul.addr %s189, 8
      %s191 = scalar_lea.vmem %s0, %s190
      %p192 = scmp.lt.s32.totalorder %s15, 1
      %s193 = scalar_select %p192, %s15, 1
      %s194 = smul.addr %s193, 8
      %s195 = scalar_lea.vmem %s4, %s194
      %v196 = vld [vmem:[%s191] sm:$0xff]
      %v197 = vld [vmem:[%s191 + $0x8] sm:$0xff]
      %v198 = vpack.c.bf16 %v196, %v196
      %v199 = vpack.c.bf16 %v197, %v197
      %v200 = vld [vmem:[%s1] sm:$0xf]
      %v201 = vld [vmem:[%s1 + $0x4] sm:$0xf]
      %v202 = vld [vmem:[%s1 + $0x8] sm:$0xf]
      %v203 = vld [vmem:[%s1 + $0xc] sm:$0xf]
      %v204 = vld [vmem:[%s1 + $0x10] sm:$0xf]
      %v205 = vld [vmem:[%s1 + $0x14] sm:$0xf]
      %v206 = vld [vmem:[%s1 + $0x18] sm:$0xf]
      %v207 = vld [vmem:[%s1 + $0x1c] sm:$0xf]
      %v208 = vld [vmem:[%s1 + $0x20] sm:$0xf]
      %v209 = vld [vmem:[%s1 + $0x24] sm:$0xf]
      %v210 = vld [vmem:[%s1 + $0x28] sm:$0xf]
      %v211 = vld [vmem:[%s1 + $0x2c] sm:$0xf]
      %v212 = vld [vmem:[%s1 + $0x30] sm:$0xf]
      %v213 = vld [vmem:[%s1 + $0x34] sm:$0xf]
      %v214 = vld [vmem:[%s1 + $0x38] sm:$0xf]
      %v215 = vld [vmem:[%s1 + $0x3c] sm:$0xf]
      %v216 = vld [vmem:[%s1 + $0x40] sm:$0xf]
      %v217 = vld [vmem:[%s1 + $0x44] sm:$0xf]
      %v218 = vld [vmem:[%s1 + $0x48] sm:$0xf]
      %v219 = vld [vmem:[%s1 + $0x4c] sm:$0xf]
      %v220 = vld [vmem:[%s1 + $0x50] sm:$0xf]
      %v221 = vld [vmem:[%s1 + $0x54] sm:$0xf]
      %v222 = vld [vmem:[%s1 + $0x58] sm:$0xf]
      %v223 = vld [vmem:[%s1 + $0x5c] sm:$0xf]
      %v224 = vld [vmem:[%s1 + $0x60] sm:$0xf]
      %v225 = vld [vmem:[%s1 + $0x64] sm:$0xf]
      %v226 = vld [vmem:[%s1 + $0x68] sm:$0xf]
      %v227 = vld [vmem:[%s1 + $0x6c] sm:$0xf]
      %v228 = vld [vmem:[%s1 + $0x70] sm:$0xf]
      %v229 = vld [vmem:[%s1 + $0x74] sm:$0xf]
      %v230 = vld [vmem:[%s1 + $0x78] sm:$0xf]
      %v231 = vld [vmem:[%s1 + $0x7c] sm:$0xf]
      %v232 = vld [vmem:[%s2] sm:$0x1]
      %v234 = vperm.slane %v232, 0
      %v268 = vunpack.c.l.b16 %v200
      %v269 = vunpack.c.l.b16 %v201
      %v270 = vunpack.c.l.b16 %v202
      %v271 = vunpack.c.l.b16 %v203
      %v272 = vunpack.c.l.b16 %v204
      %v273 = vunpack.c.l.b16 %v205
      %v274 = vunpack.c.l.b16 %v206
      %v275 = vunpack.c.l.b16 %v207
      %v276 = vunpack.c.l.b16 %v208
      %v277 = vunpack.c.l.b16 %v209
      %v278 = vunpack.c.l.b16 %v210
      %v279 = vunpack.c.l.b16 %v211
      %v280 = vunpack.c.l.b16 %v212
      %v281 = vunpack.c.l.b16 %v213
      %v282 = vunpack.c.l.b16 %v214
      %v283 = vunpack.c.l.b16 %v215
      %v284 = vunpack.c.l.b16 %v216
      %v285 = vunpack.c.l.b16 %v217
      %v286 = vunpack.c.l.b16 %v218
      %v287 = vunpack.c.l.b16 %v219
      %v288 = vunpack.c.l.b16 %v220
      %v289 = vunpack.c.l.b16 %v221
      %v290 = vunpack.c.l.b16 %v222
      %v291 = vunpack.c.l.b16 %v223
      %v292 = vunpack.c.l.b16 %v224
      %v293 = vunpack.c.l.b16 %v225
      %v294 = vunpack.c.l.b16 %v226
      %v295 = vunpack.c.l.b16 %v227
      %v296 = vunpack.c.l.b16 %v228
      %v297 = vunpack.c.l.b16 %v229
      %v298 = vunpack.c.l.b16 %v230
      %v299 = vunpack.c.l.b16 %v231
      %v300 = vpack.c.b16 %v269, %v268
      %v301 = vpack.c.b16 %v271, %v270
      %v302 = vpack.c.b16 %v273, %v272
      %v303 = vpack.c.b16 %v275, %v274
      %v304 = vpack.c.b16 %v277, %v276
      %v305 = vpack.c.b16 %v279, %v278
      %v306 = vpack.c.b16 %v281, %v280
      %v307 = vpack.c.b16 %v283, %v282
      %v308 = vpack.c.b16 %v285, %v284
      %v309 = vpack.c.b16 %v287, %v286
      %v310 = vpack.c.b16 %v289, %v288
      %v311 = vpack.c.b16 %v291, %v290
      %v312 = vpack.c.b16 %v293, %v292
      %v313 = vpack.c.b16 %v295, %v294
      %v314 = vpack.c.b16 %v297, %v296
      %v315 = vpack.c.b16 %v299, %v298
      %332 = vmatpush.bf16.msra.mxu0 %v307
      %333 = vmatpush.bf16.msra.mxu0 %v306
      %334 = vmatpush.bf16.msra.mxu0 %v305
      %335 = vmatpush.bf16.msra.mxu0 %v304
      %336 = vmatpush.bf16.msra.mxu0 %v303
      %337 = vmatpush.bf16.msra.mxu0 %v302
      %338 = vmatpush.bf16.msra.mxu0 %v301
      %339 = vmatpush.bf16.msra.mxu0 %v300
      %340 = vmatmul.bf16.gmra.mxu0 %v198
      %v341 = vpop.f32.mrf.mxu0
      %v342 = vadd.f32 %v234, %v341
      %v343 = vpop.f32.mrf.mxu0
      %344 = vdwg.mxu0
      %345 = vmatpush.bf16.msra.mxu0 %v315
      %346 = vmatpush.bf16.msra.mxu0 %v314
      %347 = vmatpush.bf16.msra.mxu0 %v313
      %348 = vmatpush.bf16.msra.mxu0 %v312
      %349 = vmatpush.bf16.msra.mxu0 %v311
      %350 = vmatpush.bf16.msra.mxu0 %v310
      %351 = vmatpush.bf16.msra.mxu0 %v309
      %352 = vmatpush.bf16.msra.mxu0 %v308
      %353 = vmatmul.bf16.gmra.mxu0 %v199
      %v354 = vpop.f32.mrf.mxu0
      %v355 = vadd.f32 %v342, %v354
      %v356 = vpop.f32.mrf.mxu0
      %357 = vdwg.mxu0
      %v358 = vld [vmem:[%s3] sm:$0xff]
      %v359 = vadd.f32 %v355, %v358
      %vm360 = vcmask 261120
      %361 = vst.msk [vmem:[%s195] sm:$0xff] %vm360, %v359
      %p362 = scmp.lt.s32.totalorder %s15, 1
      %s363 = scalar_select %p362, %s15, 1
      %s364 = smul.addr %s363, 8
      %s365 = scalar_lea.vmem %s4, %s364
      // Predicated region
      $region37: #{_lambda_.4} parent=35 // pred_check
        %p366 = pneg %p122
      $region38: #{_lambda_.4} parent=35 // pred_check_branch
        %368 = sbr.rel (%p366) target = $region40
      $region39: #{_lambda_.4} parent=35 // pred_region
        _
      $region40: #{_lambda_.4} parent=35 // pred_fallthru
        _
    $region36: #{_lambda_.4} parent=5 // pred_fallthru
      _
    %p369 = scmp.le.s32.totalorder 2, %s10
    // Predicated region
    $region41: #{_lambda_.4} parent=5 // pred_check
      %p370 = pneg %p369
    $region42: #{_lambda_.4} parent=5 // pred_check_branch
      %372 = sbr.rel (%p370) target = $region44
    $region43: #{_lambda_.4} parent=5 // pred_region
      %s373 = ssub.s32 %s10, 2
      // Predicated region
      $region45: #{_lambda_.4} parent=43 // pred_check
        %p374 = pneg %p128
      $region46: #{_lambda_.4} parent=43 // pred_check_branch
        %376 = sbr.rel (%p374) target = $region48
      $region47: #{_lambda_.4} parent=43 // pred_region
        %p377 = scmp.lt.s32.totalorder %s16, 1
        %s378 = scalar_select %p377, %s16, 1
        %s379 = smul.addr %s378, 8
        %s380 = scalar_lea.vmem %s4, %s379
      $region48: #{_lambda_.4} parent=43 // pred_fallthru
        _
    $region44: #{_lambda_.4} parent=5 // pred_fallthru
      _
  $region6: #{_lambda_.4} parent=0 // loop_footer
    %s14 = sadd.s32 1, %s10
  $region7: #{_lambda_.4} parent=0 // loop_footer_branch
    %9 = sbr.rel target = $region3
  $region8: #{_lambda_.4} parent=0 // loop_exit
    _

// kernel: _lambda_.7
$region0: #{_lambda_.7}
  #allocation0 [shape = 'u32[]', space=smem, size = 0x4, offset = 0x4, fixed_abs, tag = 'smem constant byte address 0x4 - core index']
  #allocation1 [shape = 'u32[72,128]{1,0:T(1,128)}', space=vmem, size = 0x9000, scoped, tag = 'internal scratch']
  %s0 = inlined_call_operand.vmem [shape: f32[2,32], index: 0, kind: input, shape index: {}]
  %s1 = inlined_call_operand.vmem [shape: bf16[32,64], index: 1, kind: input, shape index: {}]
  %s2 = inlined_call_operand.vmem [shape: f32[1,64], index: 2, kind: input, shape index: {}]
  %s3 = inlined_call_operand.vmem [shape: bf16[64,10], index: 3, kind: input, shape index: {}]
  %s4 = inlined_call_operand.vmem [shape: f32[1,10], index: 4, kind: input, shape index: {}]
  %s5 = inlined_call_operand.hbm [shape: f32[2,10], index: 5, kind: output, shape index: {}]
  %s6 = sld [smem:[#allocation0]]
  $region30: #{_lambda_.7} parent=0
    _
  %s8 = ssub.s32 1, %s6
  %s9 = scalar_select 0, %s8, %s6
  $region1: #{_lambda_.7} parent=0
    #allocation2 [shape = 'u8[1024]{0}', space=vmem, size = 0x400, scoped, tag = 'output window, operand 0, single buffered']
    #allocation3 [shape = 's32[1]{0}', space=sflag, size = 0x4, scoped, tag = 'scoped memory for _lambda_.7']
    %10 = vsyncpa [#allocation3], 0
    // Predicated region
    $region2: #{_lambda_.7} parent=1 // pred_check
      _
    $region3: #{_lambda_.7} parent=1 // pred_check_branch
      %12 = sbr.rel (0) target = $region5
    $region4: #{_lambda_.7} parent=1 // pred_region
      _
    $region5: #{_lambda_.7} parent=1 // pred_fallthru
      _
    // Predicated region
    $region6: #{_lambda_.7} parent=1 // pred_check
      _
    $region7: #{_lambda_.7} parent=1 // pred_check_branch
      %14 = sbr.rel (0) target = $region9
    $region8: #{_lambda_.7} parent=1 // pred_region
      _
    $region9: #{_lambda_.7} parent=1 // pred_fallthru
      _
    // Predicated region
    $region10: #{_lambda_.7} parent=1 // pred_check
      _
    $region11: #{_lambda_.7} parent=1 // pred_check_branch
      %16 = sbr.rel (0) target = $region13
    $region12: #{_lambda_.7} parent=1 // pred_region
      _
    $region13: #{_lambda_.7} parent=1 // pred_fallthru
      _
    // Predicated region
    $region14: #{_lambda_.7} parent=1 // pred_check
      _
    $region15: #{_lambda_.7} parent=1 // pred_check_branch
      %18 = sbr.rel (0) target = $region17
    $region16: #{_lambda_.7} parent=1 // pred_region
      _
    $region17: #{_lambda_.7} parent=1 // pred_fallthru
      _
    // Predicated region
    $region18: #{_lambda_.7} parent=1 // pred_check
      _
    $region19: #{_lambda_.7} parent=1 // pred_check_branch
      %20 = sbr.rel (0) target = $region21
    $region20: #{_lambda_.7} parent=1 // pred_region
      _
    $region21: #{_lambda_.7} parent=1 // pred_fallthru
      _
    %v22 = vld [vmem:[%s0] sm:$0x3]
    %v23 = vpack.c.bf16 %v22, %v22
    %v24 = vld [vmem:[%s1] sm:$0xf]
    %v25 = vld [vmem:[%s1 + $0x4] sm:$0xf]
    %v26 = vld [vmem:[%s1 + $0x8] sm:$0xf]
    %v27 = vld [vmem:[%s1 + $0xc] sm:$0xf]
    %v28 = vld [vmem:[%s2] sm:$0x1]
    %v30 = vperm.slane %v28, 0
    %v36 = vunpack.c.l.b16 %v24
    %v37 = vunpack.c.l.b16 %v25
    %v38 = vunpack.c.l.b16 %v26
    %v39 = vunpack.c.l.b16 %v27
    %v40 = vpack.c.b16 %v37, %v36
    %v41 = vpack.c.b16 %v39, %v38
    %vm44 = vcmask 261120
    %v46 = vsel %vm44, %v23, 0
    %48 = vmatpush.bf16.msra.mxu0 0
    %49 = vmatpush.bf16.msra.mxu0 0
    %50 = vmatpush.bf16.msra.mxu0 0
    %51 = vmatpush.bf16.msra.mxu0 0
    %52 = vmatpush.bf16.msra.mxu0 0
    %53 = vmatpush.bf16.msra.mxu0 0
    %54 = vmatpush.bf16.msra.mxu0 %v41
    %55 = vmatpush.bf16.msra.mxu0 %v40
    %56 = vmatmul.bf16.gmra.mxu0 %v46
    %v57 = vpop.f32.mrf.mxu0
    %v58 = vadd.f32 %v30, %v57
    %v59 = vpop.f32.mrf.mxu0
    %60 = vdwg.mxu0
    %v61 = vmul.f32 %v58, 0.5
    %v62 = vmul.f32 %v58, 0.044715
    %v63 = vmul.f32 %v62, %v58
    %v64 = vmul.f32 %v63, %v58
    %v65 = vadd.f32 %v58, %v64
    %v66 = vmul.f32 %v65, 0.7978846
    %v67 = vtanh.pop %v66
    %v68 = vadd.f32 %v67, 1.0
    %v69 = vmul.f32 %v61, %v68
    %v70 = vpack.c.bf16 %v69, %v69
    %v71 = vld [vmem:[%s3] sm:$0xf]
    %v72 = vld [vmem:[%s3 + $0x4] sm:$0xf]
    %v73 = vld [vmem:[%s3 + $0x8] sm:$0xf]
    %v74 = vld [vmem:[%s3 + $0xc] sm:$0xf]
    %v75 = vld [vmem:[%s3 + $0x10] sm:$0xf]
    %v76 = vld [vmem:[%s3 + $0x14] sm:$0xf]
    %v77 = vld [vmem:[%s3 + $0x18] sm:$0xf]
    %v78 = vld [vmem:[%s3 + $0x1c] sm:$0xf]
    %v79 = vld [vmem:[%s4] sm:$0x1]
    %v81 = vperm.slane %v79, 0
    %v91 = vunpack.c.l.b16 %v71
    %v92 = vunpack.c.l.b16 %v72
    %v93 = vunpack.c.l.b16 %v73
    %v94 = vunpack.c.l.b16 %v74
    %v95 = vunpack.c.l.b16 %v75
    %v96 = vunpack.c.l.b16 %v76
    %v97 = vunpack.c.l.b16 %v77
    %v98 = vunpack.c.l.b16 %v78
    %v99 = vpack.c.b16 %v92, %v91
    %v100 = vpack.c.b16 %v94, %v93
    %v101 = vpack.c.b16 %v96, %v95
    %v102 = vpack.c.b16 %v98, %v97
    %vm107 = vcmask 523264
    %v109 = vsel %vm107, %v70, 0
    %111 = vmatpush.bf16.msra.mxu0 0
    %112 = vmatpush.bf16.msra.mxu0 0
    %113 = vmatpush.bf16.msra.mxu0 0
    %114 = vmatpush.bf16.msra.mxu0 0
    %115 = vmatpush.bf16.msra.mxu0 %v102
    %116 = vmatpush.bf16.msra.mxu0 %v101
    %117 = vmatpush.bf16.msra.mxu0 %v100
    %118 = vmatpush.bf16.msra.mxu0 %v99
    %119 = vmatmul.bf16.gmra.mxu0 %v109
    %v120 = vpop.f32.mrf.mxu0
    %v121 = vadd.f32 %v81, %v120
    %v122 = vpop.f32.mrf.mxu0
    %123 = vdwg.mxu0
    %vm124 = vcmask 74752
    %125 = vst.msk [vmem:[#allocation2] sm:$0x3] %vm124, %v121
    // Predicated region
    $region22: #{_lambda_.7} parent=1 // pred_check
      _
    $region23: #{_lambda_.7} parent=1 // pred_check_branch
      %127 = sbr.rel (0) target = $region25
    $region24: #{_lambda_.7} parent=1 // pred_region
      %129 = vsyncadd [#allocation3], 0
      %s131 = sshll.u32 [#allocation2], 4
      %s132 = int_to_ptr.vmem [resolvable:$true] %s131
      %s133 = sshll.u32 %s5, 4
      %s134 = int_to_ptr.hbm [resolvable:$true] %s133
      %136 = dma.vmem_to_hbm [thread:$0]  %s132, 32, %s134, [#allocation3]
    $region25: #{_lambda_.7} parent=1 // pred_fallthru
      _
    // Predicated region
    $region26: #{_lambda_.7} parent=1 // pred_check
      _
    $region27: #{_lambda_.7} parent=1 // pred_check_branch
      %138 = sbr.rel (0) target = $region29
    $region28: #{_lambda_.7} parent=1 // pred_region
      %140 = dma.done [#allocation3], 32
    $region29: #{_lambda_.7} parent=1 // pred_fallthru
      _
    %141 = vsyncpa [#allocation3], 1

// kernel: _lambda_.5
$region0: #{_lambda_.5}
  #allocation0 [shape = 'u32[]', space=smem, size = 0x4, offset = 0x4, fixed_abs, tag = 'smem constant byte address 0x4 - core index']
  #allocation1 [shape = 'u32[72,128]{1,0:T(1,128)}', space=vmem, size = 0x9000, scoped, tag = 'internal scratch']
  %s0 = inlined_call_operand.vmem [shape: f32[2,8,32], index: 0, kind: input, shape index: {}]
  %s1 = inlined_call_operand.vmem [shape: f32[1,32], index: 1, kind: input, shape index: {}]
  %s2 = inlined_call_operand.vmem [shape: f32[1,32], index: 2, kind: input, shape index: {}]
  %s3 = inlined_call_operand.vmem [shape: bf16[32,96], index: 3, kind: input, shape index: {}]
  %s4 = inlined_call_operand.vmem [shape: f32[1,96], index: 4, kind: input, shape index: {}]
  %s5 = inlined_call_operand.vmem [shape: bf16[32,32], index: 5, kind: input, shape index: {}]
  %s6 = inlined_call_operand.vmem [shape: f32[1,32], index: 6, kind: input, shape index: {}]
  %s7 = inlined_call_operand.vmem [shape: f32[1,32], index: 7, kind: input, shape index: {}]
  %s8 = inlined_call_operand.vmem [shape: f32[1,32], index: 8, kind: input, shape index: {}]
  %s9 = inlined_call_operand.vmem [shape: bf16[32,128], index: 9, kind: input, shape index: {}]
  %s10 = inlined_call_operand.vmem [shape: f32[1,128], index: 10, kind: input, shape index: {}]
  %s11 = inlined_call_operand.vmem [shape: bf16[128,32], index: 11, kind: input, shape index: {}]
  %s12 = inlined_call_operand.vmem [shape: f32[1,32], index: 12, kind: input, shape index: {}]
  %s13 = inlined_call_operand.vmem [shape: f32[2,8,32], index: 13, kind: output, shape index: {}]
  %s14 = sld [smem:[#allocation0]]
  $region85: #{_lambda_.5} parent=0
    _
  %s16 = ssub.s32 1, %s14
  %s17 = scalar_select 0, %s16, %s14
  loop: start=0, step=1, limit=4
  $region2: #{_lambda_.5} parent=0 // loop_pre_header
    _
  $region3: #{_lambda_.5} parent=0 // loop_header
    %s19 = sphi 0, %s23
    %p20 = scmp.ge.s32.totalorder %s19, 4
    %s29 = sphi 0, %s31
    %s32 = sphi 0, %s29
    %s33 = sphi 0, %s32
    %s49 = sphi 0, %s33
    %s53 = sphi 0, %s53
    %s55 = sphi 0, %s53
    %s56 = sphi 0, %s55
    %s70 = sphi 0, %s56
    %s74 = sphi 0, %s74
    %s76 = sphi 0, %s74
    %s77 = sphi 0, %s76
    %s91 = sphi 0, %s77
    %s95 = sphi 0, %s95
    %s97 = sphi 0, %s95
    %s98 = sphi 0, %s97
    %s112 = sphi 0, %s98
    %s116 = sphi 0, %s116
    %s118 = sphi 0, %s116
    %s119 = sphi 0, %s118
    %s133 = sphi 0, %s119
    %s137 = sphi 0, %s137
    %s139 = sphi 0, %s137
    %s140 = sphi 0, %s139
    %s154 = sphi 0, %s140
    %s158 = sphi 0, %s158
    %s160 = sphi 0, %s158
    %s161 = sphi 0, %s160
    %s175 = sphi 0, %s161
    %s179 = sphi 0, %s179
    %s181 = sphi 0, %s179
    %s182 = sphi 0, %s181
    %s196 = sphi 0, %s182
    %s200 = sphi 0, %s200
    %s202 = sphi 0, %s200
    %s203 = sphi 0, %s202
    %s217 = sphi 0, %s203
    %s221 = sphi 0, %s221
    %s223 = sphi 0, %s221
    %s224 = sphi 0, %s223
    %s238 = sphi 0, %s224
    %s242 = sphi 0, %s242
    %s244 = sphi 0, %s242
    %s245 = sphi 0, %s244
    %s259 = sphi 0, %s245
    %s263 = sphi 0, %s263
    %s265 = sphi 0, %s263
    %s266 = sphi 0, %s265
    %s280 = sphi 0, %s266
    %s284 = sphi 0, %s284
    %s286 = sphi 0, %s284
    %s287 = sphi 0, %s286
    %s301 = sphi 0, %s287
    %s307 = sphi 0, %s309
    %s310 = sphi 0, %s307
    %s311 = sphi 0, %s310
    %s327 = sphi 0, %s311
  $region4: #{_lambda_.5} parent=0 // loop_header_branch
    %22 = sbr.rel (%p20) target = $region8
  $region5: #{_lambda_.5} parent=0 // loop_body
    %s24 = ssub.s32 %s19, 1
    %s25 = ssub.s32 %s19, 2
    %s26 = sadd.s32 %s19, 1
    %s27 = ssub.s32 %s19, %s26
    %p28 = scmp.eq.s32.totalorder %s27, 0
    %s30 = sadd.s32 %s29, 1
    %s31 = scalar_select %p28, %s29, %s30
    %p34 = pneg %p28
    %p35 = scmp.eq.s32.totalorder %s19, 1
    %p36 = por %p34, %p35
    %p37 = scmp.ne.s32.totalorder %s29, %s32
    %p38 = scmp.eq.s32.totalorder %s19, 0
    %p39 = por %p37, %p38
    %p40 = scmp.ne.s32.totalorder %s29, %s32
    %p41 = scmp.eq.s32.totalorder %s24, 1
    %p42 = por %p40, %p41
    %p43 = scmp.ne.s32.totalorder %s32, %s33
    %p44 = scmp.eq.s32.totalorder %s24, 0
    %p45 = por %p43, %p44
    %p46 = scmp.ne.s32.totalorder %s32, %s33
    %p47 = scmp.eq.s32.totalorder %s25, 1
    %p48 = por %p46, %p47
    %p50 = scmp.ne.s32.totalorder %s33, %s49
    %p51 = scmp.eq.s32.totalorder %s25, 0
    %p52 = por %p50, %p51
    %s54 = sadd.s32 %s53, 1
    %p57 = scmp.eq.s32.totalorder %s19, 1
    %p58 = scmp.ne.s32.totalorder %s53, %s55
    %p59 = scmp.eq.s32.totalorder %s19, 0
    %p60 = por %p58, %p59
    %p61 = scmp.ne.s32.totalorder %s53, %s55
    %p62 = scmp.eq.s32.totalorder %s24, 1
    %p63 = por %p61, %p62
    %p64 = scmp.ne.s32.totalorder %s55, %s56
    %p65 = scmp.eq.s32.totalorder %s24, 0
    %p66 = por %p64, %p65
    %p67 = scmp.ne.s32.totalorder %s55, %s56
    %p68 = scmp.eq.s32.totalorder %s25, 1
    %p69 = por %p67, %p68
    %p71 = scmp.ne.s32.totalorder %s56, %s70
    %p72 = scmp.eq.s32.totalorder %s25, 0
    %p73 = por %p71, %p72
    %s75 = sadd.s32 %s74, 1
    %p78 = scmp.eq.s32.totalorder %s19, 1
    %p79 = scmp.ne.s32.totalorder %s74, %s76
    %p80 = scmp.eq.s32.totalorder %s19, 0
    %p81 = por %p79, %p80
    %p82 = scmp.ne.s32.totalorder %s74, %s76
    %p83 = scmp.eq.s32.totalorder %s24, 1
    %p84 = por %p82, %p83
    %p85 = scmp.ne.s32.totalorder %s76, %s77
    %p86 = scmp.eq.s32.totalorder %s24, 0
    %p87 = por %p85, %p86
    %p88 = scmp.ne.s32.totalorder %s76, %s77
    %p89 = scmp.eq.s32.totalorder %s25, 1
    %p90 = por %p88, %p89
    %p92 = scmp.ne.s32.totalorder %s77, %s91
    %p93 = scmp.eq.s32.totalorder %s25, 0
    %p94 = por %p92, %p93
    %s96 = sadd.s32 %s95, 1
    %p99 = scmp.eq.s32.totalorder %s19, 1
    %p100 = scmp.ne.s32.totalorder %s95, %s97
    %p101 = scmp.eq.s32.totalorder %s19, 0
    %p102 = por %p100, %p101
    %p103 = scmp.ne.s32.totalorder %s95, %s97
    %p104 = scmp.eq.s32.totalorder %s24, 1
    %p105 = por %p103, %p104
    %p106 = scmp.ne.s32.totalorder %s97, %s98
    %p107 = scmp.eq.s32.totalorder %s24, 0
    %p108 = por %p106, %p107
    %p109 = scmp.ne.s32.totalorder %s97, %s98
    %p110 = scmp.eq.s32.totalorder %s25, 1
    %p111 = por %p109, %p110
    %p113 = scmp.ne.s32.totalorder %s98, %s112
    %p114 = scmp.eq.s32.totalorder %s25, 0
    %p115 = por %p113, %p114
    %s117 = sadd.s32 %s116, 1
    %p120 = scmp.eq.s32.totalorder %s19, 1
    %p121 = scmp.ne.s32.totalorder %s116, %s118
    %p122 = scmp.eq.s32.totalorder %s19, 0
    %p123 = por %p121, %p122
    %p124 = scmp.ne.s32.totalorder %s116, %s118
    %p125 = scmp.eq.s32.totalorder %s24, 1
    %p126 = por %p124, %p125
    %p127 = scmp.ne.s32.totalorder %s118, %s119
    %p128 = scmp.eq.s32.totalorder %s24, 0
    %p129 = por %p127, %p128
    %p130 = scmp.ne.s32.totalorder %s118, %s119
    %p131 = scmp.eq.s32.totalorder %s25, 1
    %p132 = por %p130, %p131
    %p134 = scmp.ne.s32.totalorder %s119, %s133
    %p135 = scmp.eq.s32.totalorder %s25, 0
    %p136 = por %p134, %p135
    %s138 = sadd.s32 %s137, 1
    %p141 = scmp.eq.s32.totalorder %s19, 1
    %p142 = scmp.ne.s32.totalorder %s137, %s139
    %p143 = scmp.eq.s32.totalorder %s19, 0
    %p144 = por %p142, %p143
    %p145 = scmp.ne.s32.totalorder %s137, %s139
    %p146 = scmp.eq.s32.totalorder %s24, 1
    %p147 = por %p145, %p146
    %p148 = scmp.ne.s32.totalorder %s139, %s140
    %p149 = scmp.eq.s32.totalorder %s24, 0
    %p150 = por %p148, %p149
    %p151 = scmp.ne.s32.totalorder %s139, %s140
    %p152 = scmp.eq.s32.totalorder %s25, 1
    %p153 = por %p151, %p152
    %p155 = scmp.ne.s32.totalorder %s140, %s154
    %p156 = scmp.eq.s32.totalorder %s25, 0
    %p157 = por %p155, %p156
    %s159 = sadd.s32 %s158, 1
    %p162 = scmp.eq.s32.totalorder %s19, 1
    %p163 = scmp.ne.s32.totalorder %s158, %s160
    %p164 = scmp.eq.s32.totalorder %s19, 0
    %p165 = por %p163, %p164
    %p166 = scmp.ne.s32.totalorder %s158, %s160
    %p167 = scmp.eq.s32.totalorder %s24, 1
    %p168 = por %p166, %p167
    %p169 = scmp.ne.s32.totalorder %s160, %s161
    %p170 = scmp.eq.s32.totalorder %s24, 0
    %p171 = por %p169, %p170
    %p172 = scmp.ne.s32.totalorder %s160, %s161
    %p173 = scmp.eq.s32.totalorder %s25, 1
    %p174 = por %p172, %p173
    %p176 = scmp.ne.s32.totalorder %s161, %s175
    %p177 = scmp.eq.s32.totalorder %s25, 0
    %p178 = por %p176, %p177
    %s180 = sadd.s32 %s179, 1
    %p183 = scmp.eq.s32.totalorder %s19, 1
    %p184 = scmp.ne.s32.totalorder %s179, %s181
    %p185 = scmp.eq.s32.totalorder %s19, 0
    %p186 = por %p184, %p185
    %p187 = scmp.ne.s32.totalorder %s179, %s181
    %p188 = scmp.eq.s32.totalorder %s24, 1
    %p189 = por %p187, %p188
    %p190 = scmp.ne.s32.totalorder %s181, %s182
    %p191 = scmp.eq.s32.totalorder %s24, 0
    %p192 = por %p190, %p191
    %p193 = scmp.ne.s32.totalorder %s181, %s182
    %p194 = scmp.eq.s32.totalorder %s25, 1
    %p195 = por %p193, %p194
    %p197 = scmp.ne.s32.totalorder %s182, %s196
    %p198 = scmp.eq.s32.totalorder %s25, 0
    %p199 = por %p197, %p198
    %s201 = sadd.s32 %s200, 1
    %p204 = scmp.eq.s32.totalorder %s19, 1
    %p205 = scmp.ne.s32.totalorder %s200, %s202
    %p206 = scmp.eq.s32.totalorder %s19, 0
    %p207 = por %p205, %p206
    %p208 = scmp.ne.s32.totalorder %s200, %s202
    %p209 = scmp.eq.s32.totalorder %s24, 1
    %p210 = por %p208, %p209
    %p211 = scmp.ne.s32.totalorder %s202, %s203
    %p212 = scmp.eq.s32.totalorder %s24, 0
    %p213 = por %p211, %p212
    %p214 = scmp.ne.s32.totalorder %s202, %s203
    %p215 = scmp.eq.s32.totalorder %s25, 1
    %p216 = por %p214, %p215
    %p218 = scmp.ne.s32.totalorder %s203, %s217
    %p219 = scmp.eq.s32.totalorder %s25, 0
    %p220 = por %p218, %p219
    %s222 = sadd.s32 %s221, 1
    %p225 = scmp.eq.s32.totalorder %s19, 1
    %p226 = scmp.ne.s32.totalorder %s221, %s223
    %p227 = scmp.eq.s32.totalorder %s19, 0
    %p228 = por %p226, %p227
    %p229 = scmp.ne.s32.totalorder %s221, %s223
    %p230 = scmp.eq.s32.totalorder %s24, 1
    %p231 = por %p229, %p230
    %p232 = scmp.ne.s32.totalorder %s223, %s224
    %p233 = scmp.eq.s32.totalorder %s24, 0
    %p234 = por %p232, %p233
    %p235 = scmp.ne.s32.totalorder %s223, %s224
    %p236 = scmp.eq.s32.totalorder %s25, 1
    %p237 = por %p235, %p236
    %p239 = scmp.ne.s32.totalorder %s224, %s238
    %p240 = scmp.eq.s32.totalorder %s25, 0
    %p241 = por %p239, %p240
    %s243 = sadd.s32 %s242, 1
    %p246 = scmp.eq.s32.totalorder %s19, 1
    %p247 = scmp.ne.s32.totalorder %s242, %s244
    %p248 = scmp.eq.s32.totalorder %s19, 0
    %p249 = por %p247, %p248
    %p250 = scmp.ne.s32.totalorder %s242, %s244
    %p251 = scmp.eq.s32.totalorder %s24, 1
    %p252 = por %p250, %p251
    %p253 = scmp.ne.s32.totalorder %s244, %s245
    %p254 = scmp.eq.s32.totalorder %s24, 0
    %p255 = por %p253, %p254
    %p256 = scmp.ne.s32.totalorder %s244, %s245
    %p257 = scmp.eq.s32.totalorder %s25, 1
    %p258 = por %p256, %p257
    %p260 = scmp.ne.s32.totalorder %s245, %s259
    %p261 = scmp.eq.s32.totalorder %s25, 0
    %p262 = por %p260, %p261
    %s264 = sadd.s32 %s263, 1
    %p267 = scmp.eq.s32.totalorder %s19, 1
    %p268 = scmp.ne.s32.totalorder %s263, %s265
    %p269 = scmp.eq.s32.totalorder %s19, 0
    %p270 = por %p268, %p269
    %p271 = scmp.ne.s32.totalorder %s263, %s265
    %p272 = scmp.eq.s32.totalorder %s24, 1
    %p273 = por %p271, %p272
    %p274 = scmp.ne.s32.totalorder %s265, %s266
    %p275 = scmp.eq.s32.totalorder %s24, 0
    %p276 = por %p274, %p275
    %p277 = scmp.ne.s32.totalorder %s265, %s266
    %p278 = scmp.eq.s32.totalorder %s25, 1
    %p279 = por %p277, %p278
    %p281 = scmp.ne.s32.totalorder %s266, %s280
    %p282 = scmp.eq.s32.totalorder %s25, 0
    %p283 = por %p281, %p282
    %s285 = sadd.s32 %s284, 1
    %p288 = scmp.eq.s32.totalorder %s19, 1
    %p289 = scmp.ne.s32.totalorder %s284, %s286
    %p290 = scmp.eq.s32.totalorder %s19, 0
    %p291 = por %p289, %p290
    %p292 = scmp.ne.s32.totalorder %s284, %s286
    %p293 = scmp.eq.s32.totalorder %s24, 1
    %p294 = por %p292, %p293
    %p295 = scmp.ne.s32.totalorder %s286, %s287
    %p296 = scmp.eq.s32.totalorder %s24, 0
    %p297 = por %p295, %p296
    %p298 = scmp.ne.s32.totalorder %s286, %s287
    %p299 = scmp.eq.s32.totalorder %s25, 1
    %p300 = por %p298, %p299
    %p302 = scmp.ne.s32.totalorder %s287, %s301
    %p303 = scmp.eq.s32.totalorder %s25, 0
    %p304 = por %p302, %p303
    %s305 = ssub.s32 %s19, %s26
    %p306 = scmp.eq.s32.totalorder %s305, 0
    %s308 = sadd.s32 %s307, 1
    %s309 = scalar_select %p306, %s307, %s308
    %p312 = pneg %p306
    %p313 = scmp.eq.s32.totalorder %s19, 1
    %p314 = por %p312, %p313
    %p315 = scmp.ne.s32.totalorder %s307, %s310
    %p316 = scmp.eq.s32.totalorder %s19, 0
    %p317 = por %p315, %p316
    %p318 = scmp.ne.s32.totalorder %s307, %s310
    %p319 = scmp.eq.s32.totalorder %s24, 1
    %p320 = por %p318, %p319
    %p321 = scmp.ne.s32.totalorder %s310, %s311
    %p322 = scmp.eq.s32.totalorder %s24, 0
    %p323 = por %p321, %p322
    %p324 = scmp.ne.s32.totalorder %s310, %s311
    %p325 = scmp.eq.s32.totalorder %s25, 1
    %p326 = por %p324, %p325
    %p328 = scmp.ne.s32.totalorder %s311, %s327
    %p329 = scmp.eq.s32.totalorder %s25, 0
    %p330 = por %p328, %p329
    %p331 = scmp.le.s32.totalorder 1, %s19
    %p332 = scmp.lt.s32.totalorder %s19, 3
    %p333 = pnand %p331, %p332
    %p334 = pneg %p333
    // Predicated region
    $region9: #{_lambda_.5} parent=5 // pred_check
      _
    $region10: #{_lambda_.5} parent=5 // pred_check_branch
      %336 = sbr.rel (%p333) target = $region12
    $region11: #{_lambda_.5} parent=5 // pred_region
      %s337 = ssub.s32 %s19, 1
      // Predicated region
      $region13: #{_lambda_.5} parent=11 // pred_check
        %p338 = pneg %p66
      $region14: #{_lambda_.5} parent=11 // pred_check_branch
        %340 = sbr.rel (%p338) target = $region16
      $region15: #{_lambda_.5} parent=11 // pred_region
        _
      $region16: #{_lambda_.5} parent=11 // pred_fallthru
        _
      // Predicated region
      $region17: #{_lambda_.5} parent=11 // pred_check
        %p341 = pneg %p87
      $region18: #{_lambda_.5} parent=11 // pred_check_branch
        %343 = sbr.rel (%p341) target = $region20
      $region19: #{_lambda_.5} parent=11 // pred_region
        _
      $region20: #{_lambda_.5} parent=11 // pred_fallthru
        _
      // Predicated region
      $region21: #{_lambda_.5} parent=11 // pred_check
        %p344 = pneg %p108
      $region22: #{_lambda_.5} parent=11 // pred_check_branch
        %346 = sbr.rel (%p344) target = $region24
      $region23: #{_lambda_.5} parent=11 // pred_region
        _
      $region24: #{_lambda_.5} parent=11 // pred_fallthru
        _
      // Predicated region
      $region25: #{_lambda_.5} parent=11 // pred_check
        %p347 = pneg %p129
      $region26: #{_lambda_.5} parent=11 // pred_check_branch
        %349 = sbr.rel (%p347) target = $region28
      $region27: #{_lambda_.5} parent=11 // pred_region
        _
      $region28: #{_lambda_.5} parent=11 // pred_fallthru
        _
      // Predicated region
      $region29: #{_lambda_.5} parent=11 // pred_check
        %p350 = pneg %p150
      $region30: #{_lambda_.5} parent=11 // pred_check_branch
        %352 = sbr.rel (%p350) target = $region32
      $region31: #{_lambda_.5} parent=11 // pred_region
        _
      $region32: #{_lambda_.5} parent=11 // pred_fallthru
        _
      // Predicated region
      $region33: #{_lambda_.5} parent=11 // pred_check
        %p353 = pneg %p171
      $region34: #{_lambda_.5} parent=11 // pred_check_branch
        %355 = sbr.rel (%p353) target = $region36
      $region35: #{_lambda_.5} parent=11 // pred_region
        _
      $region36: #{_lambda_.5} parent=11 // pred_fallthru
        _
      // Predicated region
      $region37: #{_lambda_.5} parent=11 // pred_check
        %p356 = pneg %p192
      $region38: #{_lambda_.5} parent=11 // pred_check_branch
        %358 = sbr.rel (%p356) target = $region40
      $region39: #{_lambda_.5} parent=11 // pred_region
        _
      $region40: #{_lambda_.5} parent=11 // pred_fallthru
        _
      // Predicated region
      $region41: #{_lambda_.5} parent=11 // pred_check
        %p359 = pneg %p213
      $region42: #{_lambda_.5} parent=11 // pred_check_branch
        %361 = sbr.rel (%p359) target = $region44
      $region43: #{_lambda_.5} parent=11 // pred_region
        _
      $region44: #{_lambda_.5} parent=11 // pred_fallthru
        _
      // Predicated region
      $region45: #{_lambda_.5} parent=11 // pred_check
        %p362 = pneg %p234
      $region46: #{_lambda_.5} parent=11 // pred_check_branch
        %364 = sbr.rel (%p362) target = $region48
      $region47: #{_lambda_.5} parent=11 // pred_region
        _
      $region48: #{_lambda_.5} parent=11 // pred_fallthru
        _
      // Predicated region
      $region49: #{_lambda_.5} parent=11 // pred_check
        %p365 = pneg %p255
      $region50: #{_lambda_.5} parent=11 // pred_check_branch
        %367 = sbr.rel (%p365) target = $region52
      $region51: #{_lambda_.5} parent=11 // pred_region
        _
      $region52: #{_lambda_.5} parent=11 // pred_fallthru
        _
      // Predicated region
      $region53: #{_lambda_.5} parent=11 // pred_check
        %p368 = pneg %p276
      $region54: #{_lambda_.5} parent=11 // pred_check_branch
        %370 = sbr.rel (%p368) target = $region56
      $region55: #{_lambda_.5} parent=11 // pred_region
        _
      $region56: #{_lambda_.5} parent=11 // pred_fallthru
        _
      // Predicated region
      $region57: #{_lambda_.5} parent=11 // pred_check
        %p371 = pneg %p297
      $region58: #{_lambda_.5} parent=11 // pred_check_branch
        %373 = sbr.rel (%p371) target = $region60
      $region59: #{_lambda_.5} parent=11 // pred_region
        _
      $region60: #{_lambda_.5} parent=11 // pred_fallthru
        _
    $region12: #{_lambda_.5} parent=5 // pred_fallthru
      _
    %p374 = scmp.lt.s32.totalorder %s19, 2
    // Predicated region
    $region61: #{_lambda_.5} parent=5 // pred_check
      %p375 = pneg %p374
    $region62: #{_lambda_.5} parent=5 // pred_check_branch
      %377 = sbr.rel (%p375) target = $region64
    $region63: #{_lambda_.5} parent=5 // pred_region
      // Predicated region
      $region65: #{_lambda_.5} parent=63 // pred_check
        %p378 = pneg %p39
      $region66: #{_lambda_.5} parent=63 // pred_check_branch
        %380 = sbr.rel (%p378) target = $region68
      $region67: #{_lambda_.5} parent=63 // pred_region
        %p381 = scmp.lt.s32.totalorder %s19, 1
        %s382 = scalar_select %p381, %s19, 1
        %s383 = smul.addr %s382, 8
        %s384 = scalar_lea.vmem %s0, %s383
      $region68: #{_lambda_.5} parent=63 // pred_fallthru
        _
    $region64: #{_lambda_.5} parent=5 // pred_fallthru
      _
    %p385 = scmp.le.s32.totalorder 1, %s19
    %p386 = scmp.lt.s32.totalorder %s19, 3
    %p387 = pnand %p385, %p386
    %p388 = pneg %p387
    // Predicated region
    $region69: #{_lambda_.5} parent=5 // pred_check
      _
    $region70: #{_lambda_.5} parent=5 // pred_check_branch
      %390 = sbr.rel (%p387) target = $region72
    $region71: #{_lambda_.5} parent=5 // pred_region
      %s391 = ssub.s32 %s19, 1
      %p392 = scmp.lt.s32.totalorder %s24, 1
      %s393 = scalar_select %p392, %s24, 1
      %s394 = smul.addr %s393, 8
      %s395 = scalar_lea.vmem %s0, %s394
      %p396 = pneg %p45
      %p397 = pneg %p42
      %p398 = pneg %p66
      %p399 = pneg %p63
      %p400 = pneg %p87
      %p401 = pneg %p84
      %p402 = pneg %p108
      %p403 = pneg %p105
      %p404 = pneg %p129
      %p405 = pneg %p126
      %p406 = pneg %p150
      %p407 = pneg %p147
      %p408 = pneg %p171
      %p409 = pneg %p168
      %p410 = pneg %p192
      %p411 = pneg %p189
      %p412 = pneg %p213
      %p413 = pneg %p210
      %p414 = pneg %p234
      %p415 = pneg %p231
      %p416 = pneg %p255
      %p417 = pneg %p252
      %p418 = pneg %p276
      %p419 = pneg %p273
      %p420 = pneg %p297
      %p421 = pneg %p294
      %p422 = pneg %p323
      %p423 = pneg %p320
      %p424 = scmp.lt.s32.totalorder %s24, 1
      %s425 = scalar_select %p424, %s24, 1
      %s426 = smul.addr %s425, 8
      %s427 = scalar_lea.vmem %s13, %s426
      %p428 = scmp.lt.s32.totalorder %s24, 1
      %s429 = scalar_select %p428, %s24, 1
      %s430 = smul.addr %s429, 8
      %s431 = scalar_lea.vmem %s0, %s430
      %p432 = scmp.lt.s32.totalorder %s24, 1
      %s433 = scalar_select %p432, %s24, 1
      %s434 = smul.addr %s433, 8
      %s435 = scalar_lea.vmem %s13, %s434
      %v437 = vld [vmem:[%s431] sm:$0xff]
      %v438 = vld [vmem:[%s1] sm:$0x1]
      %v439 = vld [vmem:[%s2] sm:$0x1]
      %vm440 = vcmask 261120
      %v441 = vsel %vm440, %v437, 0.0
      %442 = vadd.xlane.f32.xlu0 %v441
      %v443 = vpop.xlane.xlu0 %442
      %v444 = vrcp.pop 32.0
      %v445 = vmul.f32 32.0, %v444
      %v446 = vsub.f32 1.0, %v445
      %v447 = vmul.f32 %v444, %v446
      %v448 = vadd.f32 %v444, %v447
      %vm449 = vweird.f32 %v444
      %v450 = vsel %vm449, %v444, %v448
      %v451 = vmul.f32 %v443, %v450
      %v452 = vsub.f32 %v437, %v451
      %v453 = vmul.f32 %v452, %v452
      %v454 = vsel %vm440, %v453, 0.0
      %455 = vadd.xlane.f32.xlu0 %v454
      %v456 = vpop.xlane.xlu0 %455
      %v457 = vmul.f32 %v456, %v450
      %v458 = vadd.f32 %v457, 1e-05
      %v459 = vrsqrt.pop %v458
      %v460 = vmul.f32 %v459, %v458
      %v461 = vmul.f32 %v460, %v459
      %v462 = vmul.f32 0.5, %v461
      %v463 = vsub.f32 1.5, %v462
      %v464 = vmul.f32 %v459, %v463
      %vm465 = vweird.f32 %v458
      %vm466 = vweird.f32 %v459
      %vm467 = vmor %vm465, %vm466
      %v468 = vsel %vm467, %v459, %v464
      %v469 = vmul.f32 %v452, %v468
      %v471 = vperm.slane %v438, 0
      %v473 = vmul.f32 %v469, %v471
      %v475 = vperm.slane %v439, 0
      %v477 = vadd.f32 %v473, %v475
      %v478 = vpack.c.bf16 %v477, %v477
      %v479 = vld [vmem:[%s3] sm:$0xf]
      %v480 = vld [vmem:[%s3 + $0x4] sm:$0xf]
      %v481 = vld [vmem:[%s3 + $0x8] sm:$0xf]
      %v482 = vld [vmem:[%s3 + $0xc] sm:$0xf]
      %v483 = vld [vmem:[%s4] sm:$0x1]
      %v485 = vperm.slane %v483, 0
      %v491 = vunpack.c.l.b16 %v479
      %v492 = vunpack.c.l.b16 %v480
      %v493 = vunpack.c.l.b16 %v481
      %v494 = vunpack.c.l.b16 %v482
      %v495 = vpack.c.b16 %v492, %v491
      %v496 = vpack.c.b16 %v494, %v493
      %v500 = vsel %vm440, %v478, 0
      %502 = vmatpush.bf16.msra.mxu0 0
      %503 = vmatpush.bf16.msra.mxu0 0
      %504 = vmatpush.bf16.msra.mxu0 0
      %505 = vmatpush.bf16.msra.mxu0 0
      %506 = vmatpush.bf16.msra.mxu0 0
      %507 = vmatpush.bf16.msra.mxu0 0
      %508 = vmatpush.bf16.msra.mxu0 %v496
      %509 = vmatpush.bf16.msra.mxu0 %v495
      %510 = vmatmul.bf16.gmra.mxu0 %v500
      %v511 = vpop.f32.mrf.mxu0
      %v512 = vadd.f32 %v485, %v511
      %v513 = vpop.f32.mrf.mxu0
      %514 = vdwg.mxu0
      %516 = vrot.lane.b32.xlu0 %v512, 120
      %v517 = vpop.permute.xlu0 %516
      %519 = vrot.lane.b32.xlu0 %v512, 112
      %v520 = vpop.permute.xlu0 %519
      %522 = vrot.lane.b32.xlu0 %v512, 104
      %v523 = vpop.permute.xlu0 %522
      %v525 = vrot.slane %v520, 4
      %vm526 = vcmask 1047556
      %v527 = vsel %vm526, %v525, %v512
      %v528 = vrot.slane %v512, 4
      %v529 = vsel %vm526, %v520, %v528
      %v531 = vunpack.c.l.s4 1983009808
      %v532 = vunpack.c.0.s8 %v531
      %v533 = vperm.slane %v527, %v532
      %v535 = vunpack.c.l.s4 1983009808
      %v536 = vunpack.c.0.s8 %v535
      %v537 = vperm.slane %v529, %v536
      %v538 = vrot.slane %v523, 4
      %v539 = vsel %vm526, %v538, %v517
      %v540 = vrot.slane %v517, 4
      %v541 = vsel %vm526, %v523, %v540
      %v543 = vunpack.c.l.s4 1983009808
      %v544 = vunpack.c.0.s8 %v543
      %v545 = vperm.slane %v539, %v544
      %v547 = vunpack.c.l.s4 1983009808
      %v548 = vunpack.c.0.s8 %v547
      %v549 = vperm.slane %v541, %v548
      %v550 = vrot.slane %v545, 4
      %v551 = vsel %vm526, %v550, %v533
      %v552 = vrot.slane %v533, 4
      %v553 = vsel %vm526, %v545, %v552
      %v555 = vunpack.c.l.s4 1934713408
      %v556 = vunpack.c.0.s8 %v555
      %v557 = vperm.slane %v551, %v556
      %v559 = vunpack.c.l.s4 1934713408
      %v560 = vunpack.c.0.s8 %v559
      %v561 = vperm.slane %v553, %v560
      %v562 = vrot.slane %v549, 4
      %v563 = vsel %vm526, %v562, %v537
      %v564 = vrot.slane %v537, 4
      %v565 = vsel %vm526, %v549, %v564
      %v567 = vunpack.c.l.s4 1934713408
      %v568 = vunpack.c.0.s8 %v567
      %v569 = vperm.slane %v563, %v568
      %v571 = vunpack.c.l.s4 1934713408
      %v572 = vunpack.c.0.s8 %v571
      %v573 = vperm.slane %v565, %v572
      %v574 = vrot.slane %v557, 4
      %v575 = vsel %vm526, 0.0, %v574
      %v576 = vrot.slane %v561, 4
      %v577 = vsel %vm526, 0.0, %v576
      %v578 = vrot.slane %v569, 4
      %v579 = vsel %vm526, 0.0, %v578
      %v580 = vrot.slane %v573, 4
      %v581 = vsel %vm526, 0.0, %v580
      %v582 = vsel %vm526, %v576, %v557
      %v584 = vunpack.c.l.s4 1983009808
      %v585 = vunpack.c.0.s8 %v584
      %v586 = vperm.slane %v582, %v585
      %v587 = vrot.slane %v577, 4
      %v588 = vsel %vm526, %v587, %v575
      %v590 = vunpack.c.l.s4 1983009808
      %v591 = vunpack.c.0.s8 %v590
      %v592 = vperm.slane %v588, %v591
      %v593 = vsel %vm526, %v580, %v569
      %v595 = vunpack.c.l.s4 1983009808
      %v596 = vunpack.c.0.s8 %v595
      %v597 = vperm.slane %v593, %v596
      %v598 = vrot.slane %v581, 4
      %v599 = vsel %vm526, %v598, %v579
      %v601 = vunpack.c.l.s4 1983009808
      %v602 = vunpack.c.0.s8 %v601
      %v603 = vperm.slane %v599, %v602
      %v604 = vrot.slane %v592, 4
      %v605 = vsel %vm526, %v604, %v586
      %v606 = vrot.slane %v586, 4
      %v607 = vsel %vm526, %v592, %v606
      %v609 = vunpack.c.l.s4 1934713408
      %v610 = vunpack.c.0.s8 %v609
      %v611 = vperm.slane %v605, %v610
      %v613 = vunpack.c.l.s4 1934713408
      %v614 = vunpack.c.0.s8 %v613
      %v615 = vperm.slane %v607, %v614
      %v616 = vrot.slane %v603, 4
      %v617 = vsel %vm526, %v616, %v597
      %v618 = vrot.slane %v597, 4
      %v619 = vsel %vm526, %v603, %v618
      %v621 = vunpack.c.l.s4 1934713408
      %v622 = vunpack.c.0.s8 %v621
      %v623 = vperm.slane %v617, %v622
      %v625 = vunpack.c.l.s4 1934713408
      %v626 = vunpack.c.0.s8 %v625
      %v627 = vperm.slane %v619, %v626
      %v628 = vrot.slane %v623, 4
      %v629 = vsel %vm526, %v628, %v611
      %v630 = vrot.slane %v611, 4
      %v631 = vsel %vm526, %v623, %v630
      %v632 = vrot.slane %v627, 4
      %v633 = vsel %vm526, %v632, %v615
      %v634 = vrot.slane %v615, 4
      %v635 = vsel %vm526, %v627, %v634
      %v636 = vpack.c.bf16 %v629, %v629
      %v637 = vpack.c.bf16 %v631, %v631
      %v638 = vpack.c.bf16 %v633, %v633
      %v639 = vpack.c.bf16 %v635, %v635
      %640 = vrot.lane.b32.xlu0 %v512, 96
      %v641 = vpop.permute.xlu0 %640
      %642 = vrot.lane.b32.xlu0 %v517, 96
      %v643 = vpop.permute.xlu0 %642
      %644 = vrot.lane.b32.xlu0 %v520, 96
      %v645 = vpop.permute.xlu0 %644
      %646 = vrot.lane.b32.xlu0 %v523, 96
      %v647 = vpop.permute.xlu0 %646
      %v652 = vrot.slane %v645, 4
      %v653 = vsel %vm526, %v652, %v641
      %v654 = vrot.slane %v641, 4
      %v655 = vsel %vm526, %v645, %v654
      %v657 = vunpack.c.l.s4 1983009808
      %v658 = vunpack.c.0.s8 %v657
      %v659 = vperm.slane %v653, %v658
      %v661 = vunpack.c.l.s4 1983009808
      %v662 = vunpack.c.0.s8 %v661
      %v663 = vperm.slane %v655, %v662
      %v664 = vrot.slane %v647, 4
      %v665 = vsel %vm526, %v664, %v643
      %v666 = vrot.slane %v643, 4
      %v667 = vsel %vm526, %v647, %v666
      %v669 = vunpack.c.l.s4 1983009808
      %v670 = vunpack.c.0.s8 %v669
      %v671 = vperm.slane %v665, %v670
      %v673 = vunpack.c.l.s4 1983009808
      %v674 = vunpack.c.0.s8 %v673
      %v675 = vperm.slane %v667, %v674
      %v676 = vrot.slane %v671, 4
      %v677 = vsel %vm526, %v676, %v659
      %v678 = vrot.slane %v659, 4
      %v679 = vsel %vm526, %v671, %v678
      %v681 = vunpack.c.l.s4 1934713408
      %v682 = vunpack.c.0.s8 %v681
      %v683 = vperm.slane %v677, %v682
      %v685 = vunpack.c.l.s4 1934713408
      %v686 = vunpack.c.0.s8 %v685
      %v687 = vperm.slane %v679, %v686
      %v688 = vrot.slane %v675, 4
      %v689 = vsel %vm526, %v688, %v663
      %v690 = vrot.slane %v663, 4
      %v691 = vsel %vm526, %v675, %v690
      %v693 = vunpack.c.l.s4 1934713408
      %v694 = vunpack.c.0.s8 %v693
      %v695 = vperm.slane %v689, %v694
      %v697 = vunpack.c.l.s4 1934713408
      %v698 = vunpack.c.0.s8 %v697
      %v699 = vperm.slane %v691, %v698
      %v700 = vrot.slane %v683, 4
      %v701 = vsel %vm526, 0.0, %v700
      %v702 = vrot.slane %v687, 4
      %v703 = vsel %vm526, 0.0, %v702
      %v704 = vrot.slane %v695, 4
      %v705 = vsel %vm526, 0.0, %v704
      %v706 = vrot.slane %v699, 4
      %v707 = vsel %vm526, 0.0, %v706
      %v708 = vsel %vm526, %v702, %v683
      %v710 = vunpack.c.l.s4 1983009808
      %v711 = vunpack.c.0.s8 %v710
      %v712 = vperm.slane %v708, %v711
      %v713 = vrot.slane %v703, 4
      %v714 = vsel %vm526, %v713, %v701
      %v716 = vunpack.c.l.s4 1983009808
      %v717 = vunpack.c.0.s8 %v716
      %v718 = vperm.slane %v714, %v717
      %v719 = vsel %vm526, %v706, %v695
      %v721 = vunpack.c.l.s4 1983009808
      %v722 = vunpack.c.0.s8 %v721
      %v723 = vperm.slane %v719, %v722
      %v724 = vrot.slane %v707, 4
      %v725 = vsel %vm526, %v724, %v705
      %v727 = vunpack.c.l.s4 1983009808
      %v728 = vunpack.c.0.s8 %v727
      %v729 = vperm.slane %v725, %v728
      %v730 = vrot.slane %v718, 4
      %v731 = vsel %vm526, %v730, %v712
      %v732 = vrot.slane %v712, 4
      %v733 = vsel %vm526, %v718, %v732
      %v735 = vunpack.c.l.s4 1934713408
      %v736 = vunpack.c.0.s8 %v735
      %v737 = vperm.slane %v731, %v736
      %v739 = vunpack.c.l.s4 1934713408
      %v740 = vunpack.c.0.s8 %v739
      %v741 = vperm.slane %v733, %v740
      %v742 = vrot.slane %v729, 4
      %v743 = vsel %vm526, %v742, %v723
      %v744 = vrot.slane %v723, 4
      %v745 = vsel %vm526, %v729, %v744
      %v747 = vunpack.c.l.s4 1934713408
      %v748 = vunpack.c.0.s8 %v747
      %v749 = vperm.slane %v743, %v748
      %v751 = vunpack.c.l.s4 1934713408
      %v752 = vunpack.c.0.s8 %v751
      %v753 = vperm.slane %v745, %v752
      %v754 = vrot.slane %v749, 4
      %v755 = vsel %vm526, %v754, %v737
      %v756 = vrot.slane %v737, 4
      %v757 = vsel %vm526, %v749, %v756
      %v758 = vrot.slane %v753, 4
      %v759 = vsel %vm526, %v758, %v741
      %v760 = vrot.slane %v741, 4
      %v761 = vsel %vm526, %v753, %v760
      %v762 = vpack.c.bf16 %v755, %v755
      %v763 = vpack.c.bf16 %v757, %v757
      %v764 = vpack.c.bf16 %v759, %v759
      %v765 = vpack.c.bf16 %v761, %v761
      %766 = vrot.lane.b32.xlu0 %v512, 64
      %v767 = vpop.permute.xlu0 %766
      %768 = vrot.lane.b32.xlu0 %v517, 64
      %v769 = vpop.permute.xlu0 %768
      %770 = vrot.lane.b32.xlu0 %v520, 64
      %v771 = vpop.permute.xlu0 %770
      %772 = vrot.lane.b32.xlu0 %v523, 64
      %v773 = vpop.permute.xlu0 %772
      %v778 = vrot.slane %v771, 4
      %v779 = vsel %vm526, %v778, %v767
      %v780 = vrot.slane %v767, 4
      %v781 = vsel %vm526, %v771, %v780
      %v783 = vunpack.c.l.s4 1983009808
      %v784 = vunpack.c.0.s8 %v783
      %v785 = vperm.slane %v779, %v784
      %v787 = vunpack.c.l.s4 1983009808
      %v788 = vunpack.c.0.s8 %v787
      %v789 = vperm.slane %v781, %v788
      %v790 = vrot.slane %v773, 4
      %v791 = vsel %vm526, %v790, %v769
      %v792 = vrot.slane %v769, 4
      %v793 = vsel %vm526, %v773, %v792
      %v795 = vunpack.c.l.s4 1983009808
      %v796 = vunpack.c.0.s8 %v795
      %v797 = vperm.slane %v791, %v796
      %v799 = vunpack.c.l.s4 1983009808
      %v800 = vunpack.c.0.s8 %v799
      %v801 = vperm.slane %v793, %v800
      %v802 = vrot.slane %v797, 4
      %v803 = vsel %vm526, %v802, %v785
      %v804 = vrot.slane %v785, 4
      %v805 = vsel %vm526, %v797, %v804
      %v807 = vunpack.c.l.s4 1934713408
      %v808 = vunpack.c.0.s8 %v807
      %v809 = vperm.slane %v803, %v808
      %v811 = vunpack.c.l.s4 1934713408
      %v812 = vunpack.c.0.s8 %v811
      %v813 = vperm.slane %v805, %v812
      %v814 = vrot.slane %v801, 4
      %v815 = vsel %vm526, %v814, %v789
      %v816 = vrot.slane %v789, 4
      %v817 = vsel %vm526, %v801, %v816
      %v819 = vunpack.c.l.s4 1934713408
      %v820 = vunpack.c.0.s8 %v819
      %v821 = vperm.slane %v815, %v820
      %v823 = vunpack.c.l.s4 1934713408
      %v824 = vunpack.c.0.s8 %v823
      %v825 = vperm.slane %v817, %v824
      %v826 = vrot.slane %v809, 4
      %v827 = vsel %vm526, 0.0, %v826
      %v828 = vrot.slane %v813, 4
      %v829 = vsel %vm526, 0.0, %v828
      %v830 = vrot.slane %v821, 4
      %v831 = vsel %vm526, 0.0, %v830
      %v832 = vrot.slane %v825, 4
      %v833 = vsel %vm526, 0.0, %v832
      %v834 = vsel %vm526, %v828, %v809
      %v836 = vunpack.c.l.s4 1983009808
      %v837 = vunpack.c.0.s8 %v836
      %v838 = vperm.slane %v834, %v837
      %v839 = vrot.slane %v829, 4
      %v840 = vsel %vm526, %v839, %v827
      %v842 = vunpack.c.l.s4 1983009808
      %v843 = vunpack.c.0.s8 %v842
      %v844 = vperm.slane %v840, %v843
      %v845 = vsel %vm526, %v832, %v821
      %v847 = vunpack.c.l.s4 1983009808
      %v848 = vunpack.c.0.s8 %v847
      %v849 = vperm.slane %v845, %v848
      %v850 = vrot.slane %v833, 4
      %v851 = vsel %vm526, %v850, %v831
      %v853 = vunpack.c.l.s4 1983009808
      %v854 = vunpack.c.0.s8 %v853
      %v855 = vperm.slane %v851, %v854
      %v856 = vrot.slane %v844, 4
      %v857 = vsel %vm526, %v856, %v838
      %v858 = vrot.slane %v838, 4
      %v859 = vsel %vm526, %v844, %v858
      %v861 = vunpack.c.l.s4 1934713408
      %v862 = vunpack.c.0.s8 %v861
      %v863 = vperm.slane %v857, %v862
      %v865 = vunpack.c.l.s4 1934713408
      %v866 = vunpack.c.0.s8 %v865
      %v867 = vperm.slane %v859, %v866
      %v868 = vrot.slane %v855, 4
      %v869 = vsel %vm526, %v868, %v849
      %v870 = vrot.slane %v849, 4
      %v871 = vsel %vm526, %v855, %v870
      %v873 = vunpack.c.l.s4 1934713408
      %v874 = vunpack.c.0.s8 %v873
      %v875 = vperm.slane %v869, %v874
      %v877 = vunpack.c.l.s4 1934713408
      %v878 = vunpack.c.0.s8 %v877
      %v879 = vperm.slane %v871, %v878
      %v880 = vrot.slane %v875, 4
      %v881 = vsel %vm526, %v880, %v863
      %v882 = vrot.slane %v863, 4
      %v883 = vsel %vm526, %v875, %v882
      %v884 = vrot.slane %v879, 4
      %v885 = vsel %vm526, %v884, %v867
      %v886 = vrot.slane %v867, 4
      %v887 = vsel %vm526, %v879, %v886
      %v888 = vpack.c.bf16 %v881, %v881
      %v889 = vpack.c.bf16 %v883, %v883
      %v890 = vpack.c.bf16 %v885, %v885
      %v891 = vpack.c.bf16 %v887, %v887
      %vm892 = vcmask 64512
      %v894 = vsel %vm892, %v636, 0
      %v897 = vsel %vm892, %v762, 0
      %899 = vmatpush.bf16.xpose.msra.mxu0 0
      %900 = vmatpush.bf16.xpose.msra.mxu0 0
      %901 = vmatpush.bf16.xpose.msra.mxu0 0
      %902 = vmatpush.bf16.xpose.msra.mxu0 0
      %903 = vmatpush.bf16.xpose.msra.mxu0 0
      %904 = vmatpush.bf16.xpose.msra.mxu0 0
      %905 = vmatpush.bf16.xpose.msra.mxu0 0
      %906 = vmatpush.bf16.xpose.msra.mxu0 %v897
      %907 = vmatmul.bf16.gmra.mxu0 %v894
      %v908 = vpop.f32.mrf.mxu0
      %v909 = vadd.f32 0.0, %v908
      %v910 = vpop.f32.mrf.mxu0
      %911 = vdwg.mxu0
      %v913 = vsel %vm892, %v637, 0
      %v916 = vsel %vm892, %v763, 0
      %918 = vmatpush.bf16.xpose.msra.mxu0 0
      %919 = vmatpush.bf16.xpose.msra.mxu0 0
      %920 = vmatpush.bf16.xpose.msra.mxu0 0
      %921 = vmatpush.bf16.xpose.msra.mxu0 0
      %922 = vmatpush.bf16.xpose.msra.mxu0 0
      %923 = vmatpush.bf16.xpose.msra.mxu0 0
      %924 = vmatpush.bf16.xpose.msra.mxu0 0
      %925 = vmatpush.bf16.xpose.msra.mxu0 %v916
      %926 = vmatmul.bf16.gmra.mxu0 %v913
      %v927 = vpop.f32.mrf.mxu0
      %v928 = vadd.f32 0.0, %v927
      %v929 = vpop.f32.mrf.mxu0
      %930 = vdwg.mxu0
      %v932 = vsel %vm892, %v638, 0
      %v935 = vsel %vm892, %v764, 0
      %937 = vmatpush.bf16.xpose.msra.mxu0 0
      %938 = vmatpush.bf16.xpose.msra.mxu0 0
      %939 = vmatpush.bf16.xpose.msra.mxu0 0
      %940 = vmatpush.bf16.xpose.msra.mxu0 0
      %941 = vmatpush.bf16.xpose.msra.mxu0 0
      %942 = vmatpush.bf16.xpose.msra.mxu0 0
      %943 = vmatpush.bf16.xpose.msra.mxu0 0
      %944 = vmatpush.bf16.xpose.msra.mxu0 %v935
      %945 = vmatmul.bf16.gmra.mxu0 %v932
      %v946 = vpop.f32.mrf.mxu0
      %v947 = vadd.f32 0.0, %v946
      %v948 = vpop.f32.mrf.mxu0
      %949 = vdwg.mxu0
      %v951 = vsel %vm892, %v639, 0
      %v954 = vsel %vm892, %v765, 0
      %956 = vmatpush.bf16.xpose.msra.mxu0 0
      %957 = vmatpush.bf16.xpose.msra.mxu0 0
      %958 = vmatpush.bf16.xpose.msra.mxu0 0
      %959 = vmatpush.bf16.xpose.msra.mxu0 0
      %960 = vmatpush.bf16.xpose.msra.mxu0 0
      %961 = vmatpush.bf16.xpose.msra.mxu0 0
      %962 = vmatpush.bf16.xpose.msra.mxu0 0
      %963 = vmatpush.bf16.xpose.msra.mxu0 %v954
      %964 = vmatmul.bf16.gmra.mxu0 %v951
      %v965 = vpop.f32.mrf.mxu0
      %v966 = vadd.f32 0.0, %v965
      %v967 = vpop.f32.mrf.mxu0
      %968 = vdwg.mxu0
      %v969 = vmul.f32 %v909, 0.35355338
      %v970 = vmul.f32 %v928, 0.35355338
      %v971 = vmul.f32 %v947, 0.35355338
      %v972 = vmul.f32 %v966, 0.35355338
      %v973 = vlaneseq
      %v974 = vand.u32 %v973, 127
      %vm975 = vcmp.lt.s32.totalorder %v974, 5
      %v976 = vsel %vm975, 1, 0
      %vm977 = vcmp.eq.s32.totalorder %v976, 1
      %v978 = vsel %vm977, %v969, -1e+30
      %v979 = vsel %vm977, %v970, -1e+30
      %v980 = vsel %vm977, %v971, -1e+30
      %v981 = vsel %vm977, %v972, -1e+30
      %v982 = vsel %vm892, %v978, -inf
      %983 = vmax.xlane.f32.xlu0 %v982
      %v984 = vpop.xlane.xlu0 %983
      %v985 = vsel %vm892, %v979, -inf
      %986 = vmax.xlane.f32.xlu0 %v985
      %v987 = vpop.xlane.xlu0 %986
      %v988 = vsel %vm892, %v980, -inf
      %989 = vmax.xlane.f32.xlu0 %v988
      %v990 = vpop.xlane.xlu0 %989
      %v991 = vsel %vm892, %v981, -inf
      %992 = vmax.xlane.f32.xlu0 %v991
      %v993 = vpop.xlane.xlu0 %992
      %v994 = vsub.f32 %v978, %v984
      %v995 = vsub.f32 %v979, %v987
      %v996 = vsub.f32 %v980, %v990
      %v997 = vsub.f32 %v981, %v993
      %v998 = vmul.f32 %v994, 1.442695
      %v999 = vpow.pop %v998
      %v1000 = vmul.f32 %v995, 1.442695
      %v1001 = vpow.pop %v1000
      %v1002 = vmul.f32 %v996, 1.442695
      %v1003 = vpow.pop %v1002
      %v1004 = vmul.f32 %v997, 1.442695
      %v1005 = vpow.pop %v1004
      %v1006 = vsel %vm892, %v999, 0.0
      %1007 = vadd.xlane.f32.xlu0 %v1006
      %v1008 = vpop.xlane.xlu0 %1007
      %v1009 = vsel %vm892, %v1001, 0.0
      %1010 = vadd.xlane.f32.xlu0 %v1009
      %v1011 = vpop.xlane.xlu0 %1010
      %v1012 = vsel %vm892, %v1003, 0.0
      %1013 = vadd.xlane.f32.xlu0 %v1012
      %v1014 = vpop.xlane.xlu0 %1013
      %v1015 = vsel %vm892, %v1005, 0.0
      %1016 = vadd.xlane.f32.xlu0 %v1015
      %v1017 = vpop.xlane.xlu0 %1016
      %v1018 = vrcp.pop %v1008
      %v1019 = vrcp.pop %v1011
      %v1020 = vrcp.pop %v1014
      %v1021 = vrcp.pop %v1017
      %v1022 = vmul.f32 %v999, %v1018
      %v1023 = vmul.f32 %v1001, %v1019
      %v1024 = vmul.f32 %v1003, %v1020
      %v1025 = vmul.f32 %v1005, %v1021
      %v1026 = vpack.c.bf16 %v1022, %v1022
      %v1027 = vpack.c.bf16 %v1023, %v1023
      %v1028 = vpack.c.bf16 %v1024, %v1024
      %v1029 = vpack.c.bf16 %v1025, %v1025
      %v1031 = vsel %vm892, %v1026, 0
      %vm1033 = vcmask 1043456
      %v1035 = vsel %vm1033, %v888, 0
      %1037 = vmatpush.bf16.msra.mxu0 0
      %1038 = vmatpush.bf16.msra.mxu0 0
      %1039 = vmatpush.bf16.msra.mxu0 0
      %1040 = vmatpush.bf16.msra.mxu0 0
      %1041 = vmatpush.bf16.msra.mxu0 0
      %1042 = vmatpush.bf16.msra.mxu0 0
      %1043 = vmatpush.bf16.msra.mxu0 0
      %1044 = vmatpush.bf16.msra.mxu0 %v1035
      %1045 = vmatmul.bf16.gmra.mxu0 %v1031
      %v1046 = vpop.f32.mrf.mxu0
      %v1047 = vadd.f32 0.0, %v1046
      %v1048 = vpop.f32.mrf.mxu0
      %1049 = vdwg.mxu0
      %v1051 = vsel %vm892, %v1027, 0
      %v1054 = vsel %vm1033, %v889, 0
      %1056 = vmatpush.bf16.msra.mxu0 0
      %1057 = vmatpush.bf16.msra.mxu0 0
      %1058 = vmatpush.bf16.msra.mxu0 0
      %1059 = vmatpush.bf16.msra.mxu0 0
      %1060 = vmatpush.bf16.msra.mxu0 0
      %1061 = vmatpush.bf16.msra.mxu0 0
      %1062 = vmatpush.bf16.msra.mxu0 0
      %1063 = vmatpush.bf16.msra.mxu0 %v1054
      %1064 = vmatmul.bf16.gmra.mxu0 %v1051
      %v1065 = vpop.f32.mrf.mxu0
      %v1066 = vadd.f32 0.0, %v1065
      %v1067 = vpop.f32.mrf.mxu0
      %1068 = vdwg.mxu0
      %v1070 = vsel %vm892, %v1028, 0
      %v1073 = vsel %vm1033, %v890, 0
      %1075 = vmatpush.bf16.msra.mxu0 0
      %1076 = vmatpush.bf16.msra.mxu0 0
      %1077 = vmatpush.bf16.msra.mxu0 0
      %1078 = vmatpush.bf16.msra.mxu0 0
      %1079 = vmatpush.bf16.msra.mxu0 0
      %1080 = vmatpush.bf16.msra.mxu0 0
      %1081 = vmatpush.bf16.msra.mxu0 0
      %1082 = vmatpush.bf16.msra.mxu0 %v1073
      %1083 = vmatmul.bf16.gmra.mxu0 %v1070
      %v1084 = vpop.f32.mrf.mxu0
      %v1085 = vadd.f32 0.0, %v1084
      %v1086 = vpop.f32.mrf.mxu0
      %1087 = vdwg.mxu0
      %v1089 = vsel %vm892, %v1029, 0
      %v1092 = vsel %vm1033, %v891, 0
      %1094 = vmatpush.bf16.msra.mxu0 0
      %1095 = vmatpush.bf16.msra.mxu0 0
      %1096 = vmatpush.bf16.msra.mxu0 0
      %1097 = vmatpush.bf16.msra.mxu0 0
      %1098 = vmatpush.bf16.msra.mxu0 0
      %1099 = vmatpush.bf16.msra.mxu0 0
      %1100 = vmatpush.bf16.msra.mxu0 0
      %1101 = vmatpush.bf16.msra.mxu0 %v1092
      %1102 = vmatmul.bf16.gmra.mxu0 %v1089
      %v1103 = vpop.f32.mrf.mxu0
      %v1104 = vadd.f32 0.0, %v1103
      %v1105 = vpop.f32.mrf.mxu0
      %1106 = vdwg.mxu0
      %v1107 = vrot.slane %v1085, 4
      %v1108 = vsel %vm526, %v1107, %v1047
      %v1109 = vrot.slane %v1047, 4
      %v1110 = vsel %vm526, %v1085, %v1109
      %v1112 = vunpack.c.l.s4 1983009808
      %v1113 = vunpack.c.0.s8 %v1112
      %v1114 = vperm.slane %v1108, %v1113
      %v1116 = vunpack.c.l.s4 1983009808
      %v1117 = vunpack.c.0.s8 %v1116
      %v1118 = vperm.slane %v1110, %v1117
      %v1119 = vrot.slane %v1104, 4
      %v1120 = vsel %vm526, %v1119, %v1066
      %v1121 = vrot.slane %v1066, 4
      %v1122 = vsel %vm526, %v1104, %v1121
      %v1124 = vunpack.c.l.s4 1983009808
      %v1125 = vunpack.c.0.s8 %v1124
      %v1126 = vperm.slane %v1120, %v1125
      %v1128 = vunpack.c.l.s4 1983009808
      %v1129 = vunpack.c.0.s8 %v1128
      %v1130 = vperm.slane %v1122, %v1129
      %v1131 = vrot.slane %v1126, 4
      %v1132 = vsel %vm526, %v1131, %v1114
      %v1133 = vrot.slane %v1114, 4
      %v1134 = vsel %vm526, %v1126, %v1133
      %v1136 = vunpack.c.l.s4 1934713408
      %v1137 = vunpack.c.0.s8 %v1136
      %v1138 = vperm.slane %v1132, %v1137
      %v1140 = vunpack.c.l.s4 1934713408
      %v1141 = vunpack.c.0.s8 %v1140
      %v1142 = vperm.slane %v1134, %v1141
      %v1143 = vrot.slane %v1130, 4
      %v1144 = vsel %vm526, %v1143, %v1118
      %v1145 = vrot.slane %v1118, 4
      %v1146 = vsel %vm526, %v1130, %v1145
      %v1148 = vunpack.c.l.s4 1934713408
      %v1149 = vunpack.c.0.s8 %v1148
      %v1150 = vperm.slane %v1144, %v1149
      %v1152 = vunpack.c.l.s4 1934713408
      %v1153 = vunpack.c.0.s8 %v1152
      %v1154 = vperm.slane %v1146, %v1153
      %v1155 = vrot.slane %v1138, 4
      %v1156 = vsel %vm526, 0.0, %v1155
      %v1157 = vrot.slane %v1142, 4
      %v1158 = vsel %vm526, 0.0, %v1157
      %v1159 = vrot.slane %v1150, 4
      %v1160 = vsel %vm526, 0.0, %v1159
      %v1161 = vrot.slane %v1154, 4
      %v1162 = vsel %vm526, 0.0, %v1161
      %v1163 = vsel %vm526, %v1157, %v1138
      %v1165 = vunpack.c.l.s4 1983009808
      %v1166 = vunpack.c.0.s8 %v1165
      %v1167 = vperm.slane %v1163, %v1166
      %v1168 = vrot.slane %v1158, 4
      %v1169 = vsel %vm526, %v1168, %v1156
      %v1171 = vunpack.c.l.s4 1983009808
      %v1172 = vunpack.c.0.s8 %v1171
      %v1173 = vperm.slane %v1169, %v1172
      %v1174 = vsel %vm526, %v1161, %v1150
      %v1176 = vunpack.c.l.s4 1983009808
      %v1177 = vunpack.c.0.s8 %v1176
      %v1178 = vperm.slane %v1174, %v1177
      %v1179 = vrot.slane %v1162, 4
      %v1180 = vsel %vm526, %v1179, %v1160
      %v1182 = vunpack.c.l.s4 1983009808
      %v1183 = vunpack.c.0.s8 %v1182
      %v1184 = vperm.slane %v1180, %v1183
      %v1185 = vrot.slane %v1173, 4
      %v1186 = vsel %vm526, %v1185, %v1167
      %v1187 = vrot.slane %v1167, 4
      %v1188 = vsel %vm526, %v1173, %v1187
      %v1190 = vunpack.c.l.s4 1934713408
      %v1191 = vunpack.c.0.s8 %v1190
      %v1192 = vperm.slane %v1186, %v1191
      %v1194 = vunpack.c.l.s4 1934713408
      %v1195 = vunpack.c.0.s8 %v1194
      %v1196 = vperm.slane %v1188, %v1195
      %v1197 = vrot.slane %v1184, 4
      %v1198 = vsel %vm526, %v1197, %v1178
      %v1199 = vrot.slane %v1178, 4
      %v1200 = vsel %vm526, %v1184, %v1199
      %v1202 = vunpack.c.l.s4 1934713408
      %v1203 = vunpack.c.0.s8 %v1202
      %v1204 = vperm.slane %v1198, %v1203
      %v1206 = vunpack.c.l.s4 1934713408
      %v1207 = vunpack.c.0.s8 %v1206
      %v1208 = vperm.slane %v1200, %v1207
      %v1209 = vrot.slane %v1204, 4
      %v1210 = vsel %vm526, %v1209, %v1192
      %v1211 = vrot.slane %v1192, 4
      %v1212 = vsel %vm526, %v1204, %v1211
      %v1213 = vrot.slane %v1208, 4
      %v1214 = vsel %vm526, %v1213, %v1196
      %v1215 = vrot.slane %v1196, 4
      %v1216 = vsel %vm526, %v1208, %v1215
      %1218 = vrot.lane.b32.xlu0 %v1212, 8
      %v1219 = vpop.permute.xlu0 %1218
      %1222 = vrot.lane.b32.xlu0 %v1214, 16
      %v1223 = vpop.permute.xlu0 %1222
      %1226 = vrot.lane.b32.xlu0 %v1216, 24
      %v1227 = vpop.permute.xlu0 %1226
      %v1229 = vsel %vm892, %v1210, %v1219
      %vm1230 = vcmask 130048
      %v1231 = vsel %vm1230, %v1229, %v1223
      %vm1232 = vcmask 195584
      %v1233 = vsel %vm1232, %v1231, %v1227
      %v1234 = vpack.c.bf16 %v1233, %v1233
      %v1235 = vld [vmem:[%s5] sm:$0xf]
      %v1236 = vld [vmem:[%s5 + $0x4] sm:$0xf]
      %v1237 = vld [vmem:[%s5 + $0x8] sm:$0xf]
      %v1238 = vld [vmem:[%s5 + $0xc] sm:$0xf]
      %v1239 = vld [vmem:[%s6] sm:$0x1]
      %v1241 = vperm.slane %v1239, 0
      %v1247 = vunpack.c.l.b16 %v1235
      %v1248 = vunpack.c.l.b16 %v1236
      %v1249 = vunpack.c.l.b16 %v1237
      %v1250 = vunpack.c.l.b16 %v1238
      %v1251 = vpack.c.b16 %v1248, %v1247
      %v1252 = vpack.c.b16 %v1250, %v1249
      %v1256 = vsel %vm440, %v1234, 0
      %1258 = vmatpush.bf16.msra.mxu0 0
      %1259 = vmatpush.bf16.msra.mxu0 0
      %1260 = vmatpush.bf16.msra.mxu0 0
      %1261 = vmatpush.bf16.msra.mxu0 0
      %1262 = vmatpush.bf16.msra.mxu0 0
      %1263 = vmatpush.bf16.msra.mxu0 0
      %1264 = vmatpush.bf16.msra.mxu0 %v1252
      %1265 = vmatpush.bf16.msra.mxu0 %v1251
      %1266 = vmatmul.bf16.gmra.mxu0 %v1256
      %v1267 = vpop.f32.mrf.mxu0
      %v1268 = vadd.f32 %v1241, %v1267
      %v1269 = vpop.f32.mrf.mxu0
      %1270 = vdwg.mxu0
      %v1271 = vadd.f32 %v437, %v1268
      %v1272 = vld [vmem:[%s7] sm:$0x1]
      %v1273 = vld [vmem:[%s8] sm:$0x1]
      %v1274 = vsel %vm440, %v1271, 0.0
      %1275 = vadd.xlane.f32.xlu0 %v1274
      %v1276 = vpop.xlane.xlu0 %1275
      %v1277 = vmul.f32 %v1276, %v450
      %v1278 = vsub.f32 %v1271, %v1277
      %v1279 = vmul.f32 %v1278, %v1278
      %v1280 = vsel %vm440, %v1279, 0.0
      %1281 = vadd.xlane.f32.xlu0 %v1280
      %v1282 = vpop.xlane.xlu0 %1281
      %v1283 = vmul.f32 %v1282, %v450
      %v1284 = vadd.f32 %v1283, 1e-05
      %v1285 = vrsqrt.pop %v1284
      %v1286 = vmul.f32 %v1285, %v1284
      %v1287 = vmul.f32 %v1286, %v1285
      %v1288 = vmul.f32 0.5, %v1287
      %v1289 = vsub.f32 1.5, %v1288
      %v1290 = vmul.f32 %v1285, %v1289
      %vm1291 = vweird.f32 %v1284
      %vm1292 = vweird.f32 %v1285
      %vm1293 = vmor %vm1291, %vm1292
      %v1294 = vsel %vm1293, %v1285, %v1290
      %v1295 = vmul.f32 %v1278, %v1294
      %v1297 = vperm.slane %v1272, 0
      %v1299 = vmul.f32 %v1295, %v1297
      %v1301 = vperm.slane %v1273, 0
      %v1303 = vadd.f32 %v1299, %v1301
      %v1304 = vpack.c.bf16 %v1303, %v1303
      %v1305 = vld [vmem:[%s9] sm:$0xf]
      %v1306 = vld [vmem:[%s9 + $0x4] sm:$0xf]
      %v1307 = vld [vmem:[%s9 + $0x8] sm:$0xf]
      %v1308 = vld [vmem:[%s9 + $0xc] sm:$0xf]
      %v1309 = vld [vmem:[%s10] sm:$0x1]
      %v1311 = vperm.slane %v1309, 0
      %v1317 = vunpack.c.l.b16 %v1305
      %v1318 = vunpack.c.l.b16 %v1306
      %v1319 = vunpack.c.l.b16 %v1307
      %v1320 = vunpack.c.l.b16 %v1308
      %v1321 = vpack.c.b16 %v1318, %v1317
      %v1322 = vpack.c.b16 %v1320, %v1319
      %v1326 = vsel %vm440, %v1304, 0
      %1328 = vmatpush.bf16.msra.mxu0 0
      %1329 = vmatpush.bf16.msra.mxu0 0
      %1330 = vmatpush.bf16.msra.mxu0 0
      %1331 = vmatpush.bf16.msra.mxu0 0
      %1332 = vmatpush.bf16.msra.mxu0 0
      %1333 = vmatpush.bf16.msra.mxu0 0
      %1334 = vmatpush.bf16.msra.mxu0 %v1322
      %1335 = vmatpush.bf16.msra.mxu0 %v1321
      %1336 = vmatmul.bf16.gmra.mxu0 %v1326
      %v1337 = vpop.f32.mrf.mxu0
      %v1338 = vadd.f32 %v1311, %v1337
      %v1339 = vpop.f32.mrf.mxu0
      %1340 = vdwg.mxu0
      %v1341 = vmul.f32 %v1338, 0.5
      %v1342 = vmul.f32 %v1338, 0.044715
      %v1343 = vmul.f32 %v1342, %v1338
      %v1344 = vmul.f32 %v1343, %v1338
      %v1345 = vadd.f32 %v1338, %v1344
      %v1346 = vmul.f32 %v1345, 0.7978846
      %v1347 = vtanh.pop %v1346
      %v1348 = vadd.f32 %v1347, 1.0
      %v1349 = vmul.f32 %v1341, %v1348
      %v1350 = vpack.c.bf16 %v1349, %v1349
      %v1351 = vld [vmem:[%s11] sm:$0xf]
      %v1352 = vld [vmem:[%s11 + $0x4] sm:$0xf]
      %v1353 = vld [vmem:[%s11 + $0x8] sm:$0xf]
      %v1354 = vld [vmem:[%s11 + $0xc] sm:$0xf]
      %v1355 = vld [vmem:[%s11 + $0x10] sm:$0xf]
      %v1356 = vld [vmem:[%s11 + $0x14] sm:$0xf]
      %v1357 = vld [vmem:[%s11 + $0x18] sm:$0xf]
      %v1358 = vld [vmem:[%s11 + $0x1c] sm:$0xf]
      %v1359 = vld [vmem:[%s11 + $0x20] sm:$0xf]
      %v1360 = vld [vmem:[%s11 + $0x24] sm:$0xf]
      %v1361 = vld [vmem:[%s11 + $0x28] sm:$0xf]
      %v1362 = vld [vmem:[%s11 + $0x2c] sm:$0xf]
      %v1363 = vld [vmem:[%s11 + $0x30] sm:$0xf]
      %v1364 = vld [vmem:[%s11 + $0x34] sm:$0xf]
      %v1365 = vld [vmem:[%s11 + $0x38] sm:$0xf]
      %v1366 = vld [vmem:[%s11 + $0x3c] sm:$0xf]
      %v1367 = vld [vmem:[%s12] sm:$0x1]
      %v1369 = vperm.slane %v1367, 0
      %v1387 = vunpack.c.l.b16 %v1351
      %v1388 = vunpack.c.l.b16 %v1352
      %v1389 = vunpack.c.l.b16 %v1353
      %v1390 = vunpack.c.l.b16 %v1354
      %v1391 = vunpack.c.l.b16 %v1355
      %v1392 = vunpack.c.l.b16 %v1356
      %v1393 = vunpack.c.l.b16 %v1357
      %v1394 = vunpack.c.l.b16 %v1358
      %v1395 = vunpack.c.l.b16 %v1359
      %v1396 = vunpack.c.l.b16 %v1360
      %v1397 = vunpack.c.l.b16 %v1361
      %v1398 = vunpack.c.l.b16 %v1362
      %v1399 = vunpack.c.l.b16 %v1363
      %v1400 = vunpack.c.l.b16 %v1364
      %v1401 = vunpack.c.l.b16 %v1365
      %v1402 = vunpack.c.l.b16 %v1366
      %v1403 = vpack.c.b16 %v1388, %v1387
      %v1404 = vpack.c.b16 %v1390, %v1389
      %v1405 = vpack.c.b16 %v1392, %v1391
      %v1406 = vpack.c.b16 %v1394, %v1393
      %v1407 = vpack.c.b16 %v1396, %v1395
      %v1408 = vpack.c.b16 %v1398, %v1397
      %v1409 = vpack.c.b16 %v1400, %v1399
      %v1410 = vpack.c.b16 %v1402, %v1401
      %1419 = vmatpush.bf16.msra.mxu0 %v1410
      %1420 = vmatpush.bf16.msra.mxu0 %v1409
      %1421 = vmatpush.bf16.msra.mxu0 %v1408
      %1422 = vmatpush.bf16.msra.mxu0 %v1407
      %1423 = vmatpush.bf16.msra.mxu0 %v1406
      %1424 = vmatpush.bf16.msra.mxu0 %v1405
      %1425 = vmatpush.bf16.msra.mxu0 %v1404
      %1426 = vmatpush.bf16.msra.mxu0 %v1403
      %1427 = vmatmul.bf16.gmra.mxu0 %v1350
      %v1428 = vpop.f32.mrf.mxu0
      %v1429 = vadd.f32 %v1369, %v1428
      %v1430 = vpop.f32.mrf.mxu0
      %1431 = vdwg.mxu0
      %v1432 = vadd.f32 %v1271, %v1429
      %1433 = vst.msk [vmem:[%s435] sm:$0xff] %vm440, %v1432
      %p1434 = scmp.lt.s32.totalorder %s24, 1
      %s1435 = scalar_select %p1434, %s24, 1
      %s1436 = smul.addr %s1435, 8
      %s1437 = scalar_lea.vmem %s13, %s1436
      // Predicated region
      $region73: #{_lambda_.5} parent=71 // pred_check
        %p1438 = pneg %p320
      $region74: #{_lambda_.5} parent=71 // pred_check_branch
        %1440 = sbr.rel (%p1438) target = $region76
      $region75: #{_lambda_.5} parent=71 // pred_region
        _
      $region76: #{_lambda_.5} parent=71 // pred_fallthru
        _
    $region72: #{_lambda_.5} parent=5 // pred_fallthru
      _
    %p1441 = scmp.le.s32.totalorder 2, %s19
    // Predicated region
    $region77: #{_lambda_.5} parent=5 // pred_check
      %p1442 = pneg %p1441
    $region78: #{_lambda_.5} parent=5 // pred_check_branch
      %1444 = sbr.rel (%p1442) target = $region80
    $region79: #{_lambda_.5} parent=5 // pred_region
      %s1445 = ssub.s32 %s19, 2
      // Predicated region
      $region81: #{_lambda_.5} parent=79 // pred_check
        %p1446 = pneg %p326
      $region82: #{_lambda_.5} parent=79 // pred_check_branch
        %1448 = sbr.rel (%p1446) target = $region84
      $region83: #{_lambda_.5} parent=79 // pred_region
        %p1449 = scmp.lt.s32.totalorder %s25, 1
        %s1450 = scalar_select %p1449, %s25, 1
        %s1451 = smul.addr %s1450, 8
        %s1452 = scalar_lea.vmem %s13, %s1451
      $region84: #{_lambda_.5} parent=79 // pred_fallthru
        _
    $region80: #{_lambda_.5} parent=5 // pred_fallthru
      _
  $region6: #{_lambda_.5} parent=0 // loop_footer
    %s23 = sadd.s32 1, %s19
  $region7: #{_lambda_.5} parent=0 // loop_footer_branch
    %18 = sbr.rel target = $region3
  $region8: #{_lambda_.5} parent=0 // loop_exit
    _

</llo_original>
